<compile_context>
chip_gen: v5e
topology: v5e:2x2
jax: 0.10.0
libtpu: 0.0.40
codegen_flags: <defaults>
</compile_context>

<pallas_src>
import functools

import jax
import jax.numpy as jnp
from jax.experimental import pallas as pl
from jax.experimental.pallas import tpu as pltpu

_MIB = 1024 * 1024


def _round_up(x, m):
    return ((x + m - 1) // m) * m


def _vmem_budget():
    """Generation-aware scoped-VMEM budget with headroom for compiler scratch."""
    try:
        cap = pltpu.get_tpu_info().vmem_capacity_bytes
    except Exception:
        cap = 64 * _MIB                      # conservative fallback, safe on v7x too
    # ~85% of physical: ~54 MiB on v7x (64 MiB), ~108 MiB on v5e/v6e (128 MiB).
    return int(cap * 0.85)


def _vmem_limit(step_bytes):
    return int(min(_vmem_budget(), max(32 * _MIB, step_bytes + 16 * _MIB)))


def _pick_row_tile(Hout, Wout, Cin, Cout, KH, KW, Wp, dsize, row_tile=None,
                   target_pixels=2048, budget_bytes=24 * _MIB):
    """Pick the output-row tile size for the fused stride==1 kernel."""
    if row_tile is not None:
        return max(1, min(row_tile, Hout))
    K = KH * KW * Cin
    tr = max(1, min(Hout, target_pixels // max(Wout, 1)))

    def step_bytes(t):
        x_blk = (t + KH - 1) * Wp * Cin * dsize
        strip = t * Wout * K * dsize
        y_blk = t * Wout * Cout * dsize
        w_blk = K * Cout * dsize
        return 2 * x_blk + strip + 2 * y_blk + 2 * w_blk + 64 * Cout

    while tr > 1 and step_bytes(tr) > budget_bytes:
        tr = max(1, tr // 2)
    # prefer a tile that divides Hout exactly (avoids zero-padded output rows)
    for cand in range(tr, max(tr // 2, 1) - 1, -1):
        if Hout % cand == 0:
            return cand
    return tr


# ----------------------------------------------------------------------------------
# Kernel 1a (stride == 1): fused in-VMEM im2col + single MXU matmul + BN statistics.
#   x_ref:     (TR+KH-1, Wp, Cin)   bf16  haloed input row tile (one image)
#   w_ref:     (KH*KW*Cin, Cout)    bf16  im2col weight matrix
#   y_ref:     (TR*Wout, Cout)      bf16  conv output tile
#   sum_ref, sqsum_ref: (1, Cout)   f32   per-tile channel sums
#   strip_ref: (TR, Wout, KH*KW*Cin) bf16 VMEM scratch (in-kernel im2col strip)
# ----------------------------------------------------------------------------------
def _fused_conv_stats_kernel(x_ref, w_ref, y_ref, sum_ref, sqsum_ref, strip_ref, *,
                             KH, KW, TR, Wout, Cin):
    # Build the im2col strip once so the whole tile is a single matmul with
    # K = KH*KW*Cin (no per-tap K=Cin matmuls, no accumulator VMEM round-trips).
    for kh in range(KH):
        for kw in range(KW):
            t = kh * KW + kw
            strip_ref[:, :, t * Cin:(t + 1) * Cin] = x_ref[kh:kh + TR, kw:kw + Wout, :]
    strip = strip_ref[...].reshape(TR * Wout, KH * KW * Cin)
    acc = jnp.dot(strip, w_ref[...], preferred_element_type=jnp.float32)     # MXU
    y_ref[...] = acc.astype(y_ref.dtype)
    # BatchNorm partial statistics straight from the in-flight tile result.
    sum_ref[...] = jnp.sum(acc, axis=0, keepdims=True)
    sqsum_ref[...] = jnp.sum(acc * acc, axis=0, keepdims=True)


# ----------------------------------------------------------------------------------
# Kernel 1b (stride != 1 fallback): tiled matmul over an im2col patch matrix + stats.
# Grid = (P partitions, tiles-per-partition); stats are resident accumulators per
# partition ("arbitrary" inner axis) and the P partials are reduced in the wrapper.
# ----------------------------------------------------------------------------------
def _matmul_stats_kernel(p_ref, w_ref, y_ref, sum_ref, sqsum_ref):
    @pl.when(pl.program_id(1) == 0)
    def _():
        sum_ref[...] = jnp.zeros_like(sum_ref)
        sqsum_ref[...] = jnp.zeros_like(sqsum_ref)

    y = jnp.dot(p_ref[...], w_ref[...], preferred_element_type=jnp.float32)  # MXU
    y_ref[...] = y.astype(y_ref.dtype)
    sum_ref[...] += jnp.sum(y, axis=0, keepdims=True)
    sqsum_ref[...] += jnp.sum(y * y, axis=0, keepdims=True)


# ----------------------------------------------------------------------------------
# Kernel 2: fused affine BatchNorm + LeakyReLU on a lane-dense (rows, L) slab; emits
# f32 directly so no wrapper cast pass is needed.
# ----------------------------------------------------------------------------------
def _bn_lrelu_kernel(y_ref, scale_ref, shift_ref, o_ref, *, negative_slope):
    z = y_ref[...].astype(jnp.float32) * scale_ref[...] + shift_ref[...]
    o_ref[...] = jnp.where(z > 0, z, negative_slope * z).astype(o_ref.dtype)


def convolutional_forward(x_nchw, weight, bias, gamma, beta, *, stride=1, padding=1,
                          eps=1e-5, negative_slope=0.1, row_tile=None, tile_m=512,
                          tile_rows=4096, compute_dtype=jnp.bfloat16):
    """Conv2d -> BatchNorm2d (training-mode batch stats) -> LeakyReLU.  NCHW in/out."""
    N, Cin, H, W = x_nchw.shape
    Cout, Cin_w, KH, KW = weight.shape
    assert Cin_w == Cin
    Hout = (H + 2 * padding - KH) // stride + 1
    Wout = (W + 2 * padding - KW) // stride + 1
    M = N * Hout * Wout
    K = KH * KW * Cin
    dsize = jnp.dtype(compute_dtype).itemsize

    # TODO(synk): accept NHWC input and handle the pad border inside the kernel (masked
    # edge taps) to drop these wrapper passes over the input.
    x_nhwc = jnp.transpose(x_nchw, (0, 2, 3, 1)).astype(compute_dtype)
    Wp = W + 2 * padding

    w_mat = (jnp.transpose(weight, (2, 3, 1, 0)).reshape(K, Cout).astype(compute_dtype))

    Hout_pad = Hout
    if stride == 1:
        # ---- Pallas kernel 1a: fused im2col conv (per row tile) + BN statistics ----
        TR = _pick_row_tile(Hout, Wout, Cin, Cout, KH, KW, Wp, dsize, row_tile)
        T = pl.cdiv(Hout, TR)
        Hout_pad = T * TR
        TRH = TR + KH - 1
        THW = TR * Wout
        # conv halo padding + extra zero rows so row tiles cover Hout exactly
        xp = jnp.pad(x_nhwc, ((0, 0), (padding, padding + (Hout_pad - Hout)),
                              (padding, padding), (0, 0)))
        if T == 1:
            x_tiles = xp[:, None]
        else:
            # one gather pass materializing the (KH-1)-row halo per tile so kernel-side
            # BlockSpecs stay plain blocked (auto double-buffered pipeline).
            x_tiles = jnp.stack([xp[:, t * TR: t * TR + TRH] for t in range(T)], axis=1)

        step_bytes = (2 * TRH * Wp * Cin * dsize + THW * K * dsize
                      + 2 * THW * Cout * dsize + 2 * K * Cout * dsize + 64 * Cout)
        y, sums, sqsums = pl.pallas_call(
            functools.partial(_fused_conv_stats_kernel,
                              KH=KH, KW=KW, TR=TR, Wout=Wout, Cin=Cin),
            out_shape=(
                jax.ShapeDtypeStruct((N, T, THW, Cout), compute_dtype),
                jax.ShapeDtypeStruct((N, T, 1, Cout), jnp.float32),
                jax.ShapeDtypeStruct((N, T, 1, Cout), jnp.float32),
            ),
            grid_spec=pltpu.PrefetchScalarGridSpec(
                num_scalar_prefetch=0,
                grid=(N, T),
                in_specs=[
                    pl.BlockSpec((None, None, TRH, Wp, Cin),
                                 lambda n, t: (n, t, 0, 0, 0)),
                    # TODO(synk): single-buffer this constant weight block
                    # (pipeline_mode=pl.Buffered(1)) to halve its VMEM footprint.
                    pl.BlockSpec((K, Cout), lambda n, t: (0, 0)),
                ],
                out_specs=[
                    # TODO(synk): for Cout < 128 these stores are lane-masked; a lane-dense
                    # y layout would need an in-kernel repack (skipped to avoid extra HBM
                    # bytes / risky relayouts).
                    pl.BlockSpec((None, None, THW, Cout), lambda n, t: (n, t, 0, 0)),
                    pl.BlockSpec((None, None, 1, Cout), lambda n, t: (n, t, 0, 0)),
                    pl.BlockSpec((None, None, 1, Cout), lambda n, t: (n, t, 0, 0)),
                ],
                scratch_shapes=[pltpu.VMEM((TR, Wout, K), compute_dtype)],
            ),
            compiler_params=pltpu.CompilerParams(
                dimension_semantics=("parallel", "parallel"),   # images AND row tiles
                vmem_limit_bytes=_vmem_limit(step_bytes)),
        )(x_tiles, w_mat)
        col_sum = jnp.sum(sums, axis=(0, 1, 2))
        col_sqsum = jnp.sum(sqsums, axis=(0, 1, 2))
    else:
        # ---- fallback: wrapper-level im2col (bf16) + tiled matmul/stats kernel ----
        # TODO(synk): fuse the strided im2col into the kernel (strided tap reads) to avoid
        # materializing this ~KH*KW x larger patch matrix in HBM.
        xp = jnp.pad(x_nhwc, ((0, 0), (padding, padding), (padding, padding), (0, 0)))
        cols = []
        for kh in range(KH):
            for kw in range(KW):
                cols.append(xp[:, kh:kh + stride * (Hout - 1) + 1:stride,
                                  kw:kw + stride * (Wout - 1) + 1:stride, :])
        patches = jnp.concatenate(cols, axis=-1).reshape(M, K)
        num_tiles = pl.cdiv(M, tile_m)
        P = 2 if (num_tiles % 2 == 0 and num_tiles >= 2) else 1
        T = num_tiles // P
        M_pad = num_tiles * tile_m
        if M_pad != M:
            patches = jnp.pad(patches, ((0, M_pad - M), (0, 0)))   # zero rows add 0 to sums
        step_bytes = 2 * (tile_m * K * dsize + K * Cout * dsize + tile_m * Cout * dsize)
        # TODO(synk): for very large K add a K grid axis + f32 accumulator to keep
        # tile_m=512 inside v7x's 64 MiB VMEM.
        y, sums, sqsums = pl.pallas_call(
            _matmul_stats_kernel,
            out_shape=(
                jax.ShapeDtypeStruct((M_pad, Cout), compute_dtype),
                jax.ShapeDtypeStruct((P, 1, Cout), jnp.float32),
                jax.ShapeDtypeStruct((P, 1, Cout), jnp.float32),
            ),
            grid_spec=pltpu.PrefetchScalarGridSpec(
                num_scalar_prefetch=0,
                grid=(P, T),
                in_specs=[
                    pl.BlockSpec((tile_m, K), lambda p, i: (p * T + i, 0)),
                    pl.BlockSpec((K, Cout), lambda p, i: (0, 0)),
                ],
                out_specs=[
                    pl.BlockSpec((tile_m, Cout), lambda p, i: (p * T + i, 0)),
                    pl.BlockSpec((None, 1, Cout), lambda p, i: (p, 0, 0)),
                    pl.BlockSpec((None, 1, Cout), lambda p, i: (p, 0, 0)),
                ],
            ),
            compiler_params=pltpu.CompilerParams(
                dimension_semantics=("parallel", "arbitrary"),
                vmem_limit_bytes=_vmem_limit(step_bytes)),
        )(patches, w_mat)
        col_sum = jnp.sum(sums, axis=(0, 1))
        col_sqsum = jnp.sum(sqsums, axis=(0, 1))

    # ---- BatchNorm2d (training mode) parameters from the batch statistics ----
    mean_conv = col_sum / float(M)                 # batch mean of conv output (pre-bias)
    # The conv bias shifts the batch mean by exactly `bias`, so it cancels inside
    # train-mode BatchNorm and never needs to be added to y.
    var = jnp.maximum(col_sqsum / float(M) - mean_conv * mean_conv, 0.0)
    # TODO(synk): switch to a two-pass variance if bit-exact parity with PyTorch BN is
    # ever required (E[y^2]-E[y]^2 can cancel for large-magnitude activations).
    scale = gamma.astype(jnp.float32) / jnp.sqrt(var + eps)
    shift = beta.astype(jnp.float32) - mean_conv * scale
    # TODO(synk): running_mean/running_var buffer updates (eval-mode bookkeeping only)
    # are not materialized; they do not affect this forward output.

    # ---- Pallas kernel 2: lane-dense fused BatchNorm + LeakyReLU (f32 out) ----
    lin_len = int(y.size)
    if 128 % Cout == 0:
        L = 128
        y_lin = y.reshape(lin_len)                 # row-major => channel-fastest, free
        R = pl.cdiv(lin_len, L)
        tile_r = min(tile_rows, _round_up(R, 8))
        R_pad = _round_up(R, tile_r)
        if R_pad * L != lin_len:
            y_lin = jnp.pad(y_lin, (0, R_pad * L - lin_len))
        y2d = y_lin.reshape(R_pad, L)
        reps = L // Cout
        scale_row = jnp.tile(scale, reps).reshape(1, L)
        shift_row = jnp.tile(shift, reps).reshape(1, L)
    else:
        L = Cout                                   # Cout >= 128 multiples already lane-dense
        rows = lin_len // Cout
        y2d = y.reshape(rows, Cout)
        tile_r = min(tile_rows, _round_up(rows, 8))
        R_pad = _round_up(rows, tile_r)
        if R_pad != rows:
            y2d = jnp.pad(y2d, ((0, R_pad - rows), (0, 0)))
        scale_row = scale.reshape(1, Cout)
        shift_row = shift.reshape(1, Cout)

    out2d = pl.pallas_call(
        functools.partial(_bn_lrelu_kernel, negative_slope=negative_slope),
        out_shape=jax.ShapeDtypeStruct((R_pad, L), jnp.float32),
        grid_spec=pltpu.PrefetchScalarGridSpec(
            num_scalar_prefetch=0,
            grid=(R_pad // tile_r,),
            in_specs=[
                pl.BlockSpec((tile_r, L), lambda i: (i, 0)),
                pl.BlockSpec((1, L), lambda i: (0, 0)),
                pl.BlockSpec((1, L), lambda i: (0, 0)),
            ],
            out_specs=pl.BlockSpec((tile_r, L), lambda i: (i, 0)),
        ),
        compiler_params=pltpu.CompilerParams(
            dimension_semantics=("parallel",),
            vmem_limit_bytes=_vmem_limit(2 * tile_r * L * (dsize + 4))),
    )(y2d, scale_row, shift_row)

    out_lin = out2d.reshape(-1)[:lin_len]
    if stride == 1:
        out_nhwc = out_lin.reshape(N, Hout_pad, Wout, Cout)[:, :Hout]
    else:
        out_nhwc = out_lin[:M * Cout].reshape(N, Hout, Wout, Cout)
    # TODO(synk): the NHWC->NCHW transpose is one remaining wrapper pass; keep NHWC if the
    # consumer accepts it.
    return jnp.transpose(out_nhwc, (0, 3, 1, 2))


if __name__ == "__main__":
    key = jax.random.PRNGKey(0)
    k_x, k_w, k_b = jax.random.split(key, 3)

    # small shapes consistent with the module: conv(4 -> 8, k=3, pad=1)
    N, Cin, H, W = 2, 4, 16, 16
    Cout, KH, KW = 8, 3, 3

    x = jax.random.normal(k_x, (N, Cin, H, W), jnp.float32)

    # deterministic PyTorch-like init
    fan_in = Cin * KH * KW
    bound = 1.0 / (fan_in ** 0.5)
    weight = jax.random.uniform(k_w, (Cout, Cin, KH, KW), jnp.float32, -bound, bound)
    bias = jax.random.uniform(k_b, (Cout,), jnp.float32, -bound, bound)
    gamma = jnp.ones((Cout,), jnp.float32)    # BatchNorm2d default weight init
    beta = jnp.zeros((Cout,), jnp.float32)    # BatchNorm2d default bias init

    def reference(x, weight, bias, gamma, beta, stride, padding):
        y = jax.lax.conv_general_dilated(
            x, weight, window_strides=(stride, stride),
            padding=((padding, padding), (padding, padding)),
            dimension_numbers=("NCHW", "OIHW", "NCHW")) + bias[None, :, None, None]
        mean = y.mean(axis=(0, 2, 3), keepdims=True)
        var = y.var(axis=(0, 2, 3), keepdims=True)
        z = (gamma[None, :, None, None] * (y - mean) / jnp.sqrt(var + 1e-5)
             + beta[None, :, None, None])
        return jnp.where(z > 0, z, 0.1 * z)

    # stride == 1 path (fused in-kernel im2col + stats); row_tile=8 => 2 row tiles/image
    fwd1 = jax.jit(functools.partial(convolutional_forward, stride=1, padding=1, row_tile=8))
    out1 = fwd1(x, weight, bias, gamma, beta)
    jax.block_until_ready(out1)
    assert out1.shape == (N, Cout, H, W), out1.shape
    ref1 = reference(x, weight, bias, gamma, beta, 1, 1)
    err1 = float(jnp.max(jnp.abs(out1 - ref1)))
    assert err1 < 0.1, f"stride-1 max abs error vs reference: {err1}"

    # stride == 2 fallback path (wrapper im2col + tiled matmul/stats kernel)
    fwd2 = jax.jit(functools.partial(convolutional_forward, stride=2, padding=1))
    out2 = fwd2(x, weight, bias, gamma, beta)
    jax.block_until_ready(out2)
    Hout2 = (H + 2 - KH) // 2 + 1
    assert out2.shape == (N, Cout, Hout2, Hout2), out2.shape
    ref2 = reference(x, weight, bias, gamma, beta, 2, 1)
    err2 = float(jnp.max(jnp.abs(out2 - ref2)))
    assert err2 < 0.1, f"stride-2 max abs error vs reference: {err2}"

    print("KERNEL_OK")
</pallas_src>

<mosaic_0001>
module attributes {stable_mosaic.version = 11 : i64} {
  func.func @_fused_conv_stats_kernel(%arg0: i32, %arg1: i32, %arg2: memref<1x1x10x18x4xbf16, #tpu.memory_space<vmem>>, %arg3: memref<36x8xbf16, #tpu.memory_space<vmem>>, %arg4: memref<1x1x128x8xbf16, #tpu.memory_space<vmem>>, %arg5: memref<1x1x1x8xf32, #tpu.memory_space<vmem>>, %arg6: memref<1x1x1x8xf32, #tpu.memory_space<vmem>>, %arg7: memref<8x16x36xbf16, #tpu.memory_space<vmem>>) attributes {dimension_semantics = [#tpu.dimension_semantics<parallel>, #tpu.dimension_semantics<parallel>], iteration_bounds = array<i64: 2, 2>, scalar_prefetch = 0 : i64, scratch_operands = 1 : i64, tpu.core_type = #tpu.core_type<tc>, window_params = [{transform_indices = @transform_0, window_bounds = array<i64: 1, 1, 10, 18, 4>}, {pipeline_mode = #tpu.pipeline_mode<synchronous>, transform_indices = @transform_1, window_bounds = array<i64: 36, 8>}, {transform_indices = @transform_2, window_bounds = array<i64: 1, 1, 128, 8>}, {transform_indices = @transform_3, window_bounds = array<i64: 1, 1, 1, 8>}, {transform_indices = @transform_4, window_bounds = array<i64: 1, 1, 1, 8>}]} {
    %c0 = arith.constant 0 : index
    %c0_0 = arith.constant 0 : index
    %c0_1 = arith.constant 0 : index
    %c0_2 = arith.constant 0 : index
    %c0_3 = arith.constant 0 : index
    %0 = vector.load %arg2[%c0, %c0_0, %c0_1, %c0_2, %c0_3] : memref<1x1x10x18x4xbf16, #tpu.memory_space<vmem>>, vector<1x1x8x16x4xbf16>
    %1 = vector.shape_cast %0 : vector<1x1x8x16x4xbf16> to vector<8x16x4xbf16>
    %c0_4 = arith.constant 0 : index
    %c0_5 = arith.constant 0 : index
    %c0_6 = arith.constant 0 : index
    %2 = vector.load %arg7[%c0_4, %c0_5, %c0_6] : memref<8x16x36xbf16, #tpu.memory_space<vmem>>, vector<8x16x4xbf16>
    tpu.vector_store %arg7[%c0_4, %c0_5, %c0_6], %1 {strides = array<i32>} : memref<8x16x36xbf16, #tpu.memory_space<vmem>>, vector<8x16x4xbf16>,
    %c0_7 = arith.constant 0 : index
    %c0_8 = arith.constant 0 : index
    %c0_9 = arith.constant 0 : index
    %c1 = arith.constant 1 : index
    %c0_10 = arith.constant 0 : index
    %3 = vector.load %arg2[%c0_7, %c0_8, %c0_9, %c1, %c0_10] : memref<1x1x10x18x4xbf16, #tpu.memory_space<vmem>>, vector<1x1x8x16x4xbf16>
    %4 = vector.shape_cast %3 : vector<1x1x8x16x4xbf16> to vector<8x16x4xbf16>
    %c0_11 = arith.constant 0 : index
    %c0_12 = arith.constant 0 : index
    %c4 = arith.constant 4 : index
    %5 = vector.load %arg7[%c0_11, %c0_12, %c4] : memref<8x16x36xbf16, #tpu.memory_space<vmem>>, vector<8x16x4xbf16>
    tpu.vector_store %arg7[%c0_11, %c0_12, %c4], %4 {strides = array<i32>} : memref<8x16x36xbf16, #tpu.memory_space<vmem>>, vector<8x16x4xbf16>,
    %c0_13 = arith.constant 0 : index
    %c0_14 = arith.constant 0 : index
    %c0_15 = arith.constant 0 : index
    %c2 = arith.constant 2 : index
    %c0_16 = arith.constant 0 : index
    %6 = vector.load %arg2[%c0_13, %c0_14, %c0_15, %c2, %c0_16] : memref<1x1x10x18x4xbf16, #tpu.memory_space<vmem>>, vector<1x1x8x16x4xbf16>
    %7 = vector.shape_cast %6 : vector<1x1x8x16x4xbf16> to vector<8x16x4xbf16>
    %c0_17 = arith.constant 0 : index
    %c0_18 = arith.constant 0 : index
    %c8 = arith.constant 8 : index
    %8 = vector.load %arg7[%c0_17, %c0_18, %c8] : memref<8x16x36xbf16, #tpu.memory_space<vmem>>, vector<8x16x4xbf16>
    tpu.vector_store %arg7[%c0_17, %c0_18, %c8], %7 {strides = array<i32>} : memref<8x16x36xbf16, #tpu.memory_space<vmem>>, vector<8x16x4xbf16>,
    %c0_19 = arith.constant 0 : index
    %c0_20 = arith.constant 0 : index
    %c1_21 = arith.constant 1 : index
    %c0_22 = arith.constant 0 : index
    %c0_23 = arith.constant 0 : index
    %9 = vector.load %arg2[%c0_19, %c0_20, %c1_21, %c0_22, %c0_23] : memref<1x1x10x18x4xbf16, #tpu.memory_space<vmem>>, vector<1x1x8x16x4xbf16>
    %10 = vector.shape_cast %9 : vector<1x1x8x16x4xbf16> to vector<8x16x4xbf16>
    %c0_24 = arith.constant 0 : index
    %c0_25 = arith.constant 0 : index
    %c12 = arith.constant 12 : index
    %11 = vector.load %arg7[%c0_24, %c0_25, %c12] : memref<8x16x36xbf16, #tpu.memory_space<vmem>>, vector<8x16x4xbf16>
    tpu.vector_store %arg7[%c0_24, %c0_25, %c12], %10 {strides = array<i32>} : memref<8x16x36xbf16, #tpu.memory_space<vmem>>, vector<8x16x4xbf16>,
    %c0_26 = arith.constant 0 : index
    %c0_27 = arith.constant 0 : index
    %c1_28 = arith.constant 1 : index
    %c1_29 = arith.constant 1 : index
    %c0_30 = arith.constant 0 : index
    %12 = vector.load %arg2[%c0_26, %c0_27, %c1_28, %c1_29, %c0_30] : memref<1x1x10x18x4xbf16, #tpu.memory_space<vmem>>, vector<1x1x8x16x4xbf16>
    %13 = vector.shape_cast %12 : vector<1x1x8x16x4xbf16> to vector<8x16x4xbf16>
    %c0_31 = arith.constant 0 : index
    %c0_32 = arith.constant 0 : index
    %c16 = arith.constant 16 : index
    %14 = vector.load %arg7[%c0_31, %c0_32, %c16] : memref<8x16x36xbf16, #tpu.memory_space<vmem>>, vector<8x16x4xbf16>
    tpu.vector_store %arg7[%c0_31, %c0_32, %c16], %13 {strides = array<i32>} : memref<8x16x36xbf16, #tpu.memory_space<vmem>>, vector<8x16x4xbf16>,
    %c0_33 = arith.constant 0 : index
    %c0_34 = arith.constant 0 : index
    %c1_35 = arith.constant 1 : index
    %c2_36 = arith.constant 2 : index
    %c0_37 = arith.constant 0 : index
    %15 = vector.load %arg2[%c0_33, %c0_34, %c1_35, %c2_36, %c0_37] : memref<1x1x10x18x4xbf16, #tpu.memory_space<vmem>>, vector<1x1x8x16x4xbf16>
    %16 = vector.shape_cast %15 : vector<1x1x8x16x4xbf16> to vector<8x16x4xbf16>
    %c0_38 = arith.constant 0 : index
    %c0_39 = arith.constant 0 : index
    %c20 = arith.constant 20 : index
    %17 = vector.load %arg7[%c0_38, %c0_39, %c20] : memref<8x16x36xbf16, #tpu.memory_space<vmem>>, vector<8x16x4xbf16>
    tpu.vector_store %arg7[%c0_38, %c0_39, %c20], %16 {strides = array<i32>} : memref<8x16x36xbf16, #tpu.memory_space<vmem>>, vector<8x16x4xbf16>,
    %c0_40 = arith.constant 0 : index
    %c0_41 = arith.constant 0 : index
    %c2_42 = arith.constant 2 : index
    %c0_43 = arith.constant 0 : index
    %c0_44 = arith.constant 0 : index
    %18 = vector.load %arg2[%c0_40, %c0_41, %c2_42, %c0_43, %c0_44] : memref<1x1x10x18x4xbf16, #tpu.memory_space<vmem>>, vector<1x1x8x16x4xbf16>
    %19 = vector.shape_cast %18 : vector<1x1x8x16x4xbf16> to vector<8x16x4xbf16>
    %c0_45 = arith.constant 0 : index
    %c0_46 = arith.constant 0 : index
    %c24 = arith.constant 24 : index
    %20 = vector.load %arg7[%c0_45, %c0_46, %c24] : memref<8x16x36xbf16, #tpu.memory_space<vmem>>, vector<8x16x4xbf16>
    tpu.vector_store %arg7[%c0_45, %c0_46, %c24], %19 {strides = array<i32>} : memref<8x16x36xbf16, #tpu.memory_space<vmem>>, vector<8x16x4xbf16>,
    %c0_47 = arith.constant 0 : index
    %c0_48 = arith.constant 0 : index
    %c2_49 = arith.constant 2 : index
    %c1_50 = arith.constant 1 : index
    %c0_51 = arith.constant 0 : index
    %21 = vector.load %arg2[%c0_47, %c0_48, %c2_49, %c1_50, %c0_51] : memref<1x1x10x18x4xbf16, #tpu.memory_space<vmem>>, vector<1x1x8x16x4xbf16>
    %22 = vector.shape_cast %21 : vector<1x1x8x16x4xbf16> to vector<8x16x4xbf16>
    %c0_52 = arith.constant 0 : index
    %c0_53 = arith.constant 0 : index
    %c28 = arith.constant 28 : index
    %23 = vector.load %arg7[%c0_52, %c0_53, %c28] : memref<8x16x36xbf16, #tpu.memory_space<vmem>>, vector<8x16x4xbf16>
    tpu.vector_store %arg7[%c0_52, %c0_53, %c28], %22 {strides = array<i32>} : memref<8x16x36xbf16, #tpu.memory_space<vmem>>, vector<8x16x4xbf16>,
    %c0_54 = arith.constant 0 : index
    %c0_55 = arith.constant 0 : index
    %c2_56 = arith.constant 2 : index
    %c2_57 = arith.constant 2 : index
    %c0_58 = arith.constant 0 : index
    %24 = vector.load %arg2[%c0_54, %c0_55, %c2_56, %c2_57, %c0_58] : memref<1x1x10x18x4xbf16, #tpu.memory_space<vmem>>, vector<1x1x8x16x4xbf16>
    %25 = vector.shape_cast %24 : vector<1x1x8x16x4xbf16> to vector<8x16x4xbf16>
    %c0_59 = arith.constant 0 : index
    %c0_60 = arith.constant 0 : index
    %c32 = arith.constant 32 : index
    %26 = vector.load %arg7[%c0_59, %c0_60, %c32] : memref<8x16x36xbf16, #tpu.memory_space<vmem>>, vector<8x16x4xbf16>
    tpu.vector_store %arg7[%c0_59, %c0_60, %c32], %25 {strides = array<i32>} : memref<8x16x36xbf16, #tpu.memory_space<vmem>>, vector<8x16x4xbf16>,
    %c0_61 = arith.constant 0 : index
    %c0_62 = arith.constant 0 : index
    %c0_63 = arith.constant 0 : index
    %27 = vector.load %arg7[%c0_61, %c0_62, %c0_63] : memref<8x16x36xbf16, #tpu.memory_space<vmem>>, vector<8x16x36xbf16>
    %28 = vector.shape_cast %27 : vector<8x16x36xbf16> to vector<128x36xbf16>
    %c0_64 = arith.constant 0 : index
    %c0_65 = arith.constant 0 : index
    %29 = vector.load %arg3[%c0_64, %c0_65] : memref<36x8xbf16, #tpu.memory_space<vmem>>, vector<36x8xbf16>
    %cst = arith.constant dense<0.000000e+00> : vector<128x8xf32>
    %30 = tpu.matmul %28, %29, %cst {dimension_numbers = #tpu.dot_dimension_numbers<[1], [0], [0], [1], [0, 0, 1, 1], [], []>} : vector<128x36xbf16>, vector<36x8xbf16>, vector<128x8xf32> -> vector<128x8xf32>
    %31 = arith.truncf %30 : vector<128x8xf32> to vector<128x8xbf16>
    %c0_66 = arith.constant 0 : index
    %c0_67 = arith.constant 0 : index
    %c0_68 = arith.constant 0 : index
    %c0_69 = arith.constant 0 : index
    %32 = vector.load %arg4[%c0_66, %c0_67, %c0_68, %c0_69] : memref<1x1x128x8xbf16, #tpu.memory_space<vmem>>, vector<1x1x128x8xbf16>
    %33 = vector.shape_cast %32 : vector<1x1x128x8xbf16> to vector<128x8xbf16>
    %34 = vector.shape_cast %31 : vector<128x8xbf16> to vector<1x1x128x8xbf16>
    tpu.vector_store %arg4[%c0_66, %c0_67, %c0_68, %c0_69], %34 {strides = array<i32>} : memref<1x1x128x8xbf16, #tpu.memory_space<vmem>>, vector<1x1x128x8xbf16>,
    %cst_70 = arith.constant dense<0.000000e+00> : vector<8xf32>
    %35 = vector.multi_reduction <add>, %30, %cst_70 [0] : vector<128x8xf32> to vector<8xf32>
    %36 = vector.shape_cast %35 : vector<8xf32> to vector<1x8xf32>
    %c0_71 = arith.constant 0 : index
    %c0_72 = arith.constant 0 : index
    %c0_73 = arith.constant 0 : index
    %c0_74 = arith.constant 0 : index
    %37 = vector.load %arg5[%c0_71, %c0_72, %c0_73, %c0_74] : memref<1x1x1x8xf32, #tpu.memory_space<vmem>>, vector<1x1x1x8xf32>
    %38 = vector.shape_cast %37 : vector<1x1x1x8xf32> to vector<1x8xf32>
    %39 = vector.shape_cast %36 : vector<1x8xf32> to vector<1x1x1x8xf32>
    tpu.vector_store %arg5[%c0_71, %c0_72, %c0_73, %c0_74], %39 {strides = array<i32>} : memref<1x1x1x8xf32, #tpu.memory_space<vmem>>, vector<1x1x1x8xf32>,
    %40 = arith.mulf %30, %30 : vector<128x8xf32>
    %cst_75 = arith.constant dense<0.000000e+00> : vector<8xf32>
    %41 = vector.multi_reduction <add>, %40, %cst_75 [0] : vector<128x8xf32> to vector<8xf32>
    %42 = vector.shape_cast %41 : vector<8xf32> to vector<1x8xf32>
    %c0_76 = arith.constant 0 : index
    %c0_77 = arith.constant 0 : index
    %c0_78 = arith.constant 0 : index
    %c0_79 = arith.constant 0 : index
    %43 = vector.load %arg6[%c0_76, %c0_77, %c0_78, %c0_79] : memref<1x1x1x8xf32, #tpu.memory_space<vmem>>, vector<1x1x1x8xf32>
    %44 = vector.shape_cast %43 : vector<1x1x1x8xf32> to vector<1x8xf32>
    %45 = vector.shape_cast %42 : vector<1x8xf32> to vector<1x1x1x8xf32>
    tpu.vector_store %arg6[%c0_76, %c0_77, %c0_78, %c0_79], %45 {strides = array<i32>} : memref<1x1x1x8xf32, #tpu.memory_space<vmem>>, vector<1x1x1x8xf32>,
    return
  }
  func.func @transform_0(%arg0: i32, %arg1: i32) -> (i32, i32, i32, i32, i32) {
    %c0_i32 = arith.constant 0 : i32
    %c0_i32_0 = arith.constant 0 : i32
    %c0_i32_1 = arith.constant 0 : i32
    %c0_i32_2 = arith.constant 0 : i32
    return %arg0, %arg1, %c0_i32, %c0_i32_0, %c0_i32_1 : i32, i32, i32, i32, i32
  }
  func.func @transform_1(%arg0: i32, %arg1: i32) -> (i32, i32) {
    %c0_i32 = arith.constant 0 : i32
    %c0_i32_0 = arith.constant 0 : i32
    %c0_i32_1 = arith.constant 0 : i32
    return %c0_i32, %c0_i32_0 : i32, i32
  }
  func.func @transform_2(%arg0: i32, %arg1: i32) -> (i32, i32, i32, i32) {
    %c0_i32 = arith.constant 0 : i32
    %c0_i32_0 = arith.constant 0 : i32
    %c0_i32_1 = arith.constant 0 : i32
    return %arg0, %arg1, %c0_i32, %c0_i32_0 : i32, i32, i32, i32
  }
  func.func @transform_3(%arg0: i32, %arg1: i32) -> (i32, i32, i32, i32) {
    %c0_i32 = arith.constant 0 : i32
    %c0_i32_0 = arith.constant 0 : i32
    %c0_i32_1 = arith.constant 0 : i32
    return %arg0, %arg1, %c0_i32, %c0_i32_0 : i32, i32, i32, i32
  }
  func.func @transform_4(%arg0: i32, %arg1: i32) -> (i32, i32, i32, i32) {
    %c0_i32 = arith.constant 0 : i32
    %c0_i32_0 = arith.constant 0 : i32
    %c0_i32_1 = arith.constant 0 : i32
    return %arg0, %arg1, %c0_i32, %c0_i32_0 : i32, i32, i32, i32
  }
}

module attributes {stable_mosaic.version = 11 : i64} {
  func.func @_bn_lrelu_kernel(%arg0: i32, %arg1: memref<32x128xbf16, #tpu.memory_space<vmem>>, %arg2: memref<1x128xf32, #tpu.memory_space<vmem>>, %arg3: memref<1x128xf32, #tpu.memory_space<vmem>>, %arg4: memref<32x128xf32, #tpu.memory_space<vmem>>) attributes {dimension_semantics = [#tpu.dimension_semantics<parallel>], iteration_bounds = array<i64: 1>, scalar_prefetch = 0 : i64, scratch_operands = 0 : i64, tpu.core_type = #tpu.core_type<tc>, window_params = [{transform_indices = @transform_0, window_bounds = array<i64: 32, 128>}, {pipeline_mode = #tpu.pipeline_mode<synchronous>, transform_indices = @transform_1, window_bounds = array<i64: 1, 128>}, {pipeline_mode = #tpu.pipeline_mode<synchronous>, transform_indices = @transform_2, window_bounds = array<i64: 1, 128>}, {transform_indices = @transform_3, window_bounds = array<i64: 32, 128>}]} {
    %c0 = arith.constant 0 : index
    %c0_0 = arith.constant 0 : index
    %0 = vector.load %arg1[%c0, %c0_0] : memref<32x128xbf16, #tpu.memory_space<vmem>>, vector<32x128xbf16>
    %1 = arith.extf %0 : vector<32x128xbf16> to vector<32x128xf32>
    %c0_1 = arith.constant 0 : index
    %c0_2 = arith.constant 0 : index
    %2 = vector.load %arg2[%c0_1, %c0_2] : memref<1x128xf32, #tpu.memory_space<vmem>>, vector<1x128xf32>
    %3 = vector.broadcast %2 : vector<1x128xf32> to vector<32x128xf32>
    %4 = arith.mulf %1, %3 : vector<32x128xf32>
    %c0_3 = arith.constant 0 : index
    %c0_4 = arith.constant 0 : index
    %5 = vector.load %arg3[%c0_3, %c0_4] : memref<1x128xf32, #tpu.memory_space<vmem>>, vector<1x128xf32>
    %6 = vector.broadcast %5 : vector<1x128xf32> to vector<32x128xf32>
    %7 = arith.addf %4, %6 : vector<32x128xf32>
    %cst = arith.constant 0.000000e+00 : f32
    %8 = vector.broadcast %cst : f32 to vector<32x128xf32>
    %9 = arith.cmpf ogt, %7, %8 : vector<32x128xf32>
    %cst_5 = arith.constant 1.000000e-01 : f32
    %10 = vector.broadcast %cst_5 : f32 to vector<32x128xf32>
    %11 = arith.mulf %10, %7 : vector<32x128xf32>
    %12 = arith.select %9, %7, %11 : vector<32x128xi1>, vector<32x128xf32>
    %c0_6 = arith.constant 0 : index
    %c0_7 = arith.constant 0 : index
    %13 = vector.load %arg4[%c0_6, %c0_7] : memref<32x128xf32, #tpu.memory_space<vmem>>, vector<32x128xf32>
    tpu.vector_store %arg4[%c0_6, %c0_7], %12 {strides = array<i32>} : memref<32x128xf32, #tpu.memory_space<vmem>>, vector<32x128xf32>,
    return
  }
  func.func @transform_0(%arg0: i32) -> (i32, i32) {
    %c0_i32 = arith.constant 0 : i32
    %c0_i32_0 = arith.constant 0 : i32
    return %arg0, %c0_i32 : i32, i32
  }
  func.func @transform_1(%arg0: i32) -> (i32, i32) {
    %c0_i32 = arith.constant 0 : i32
    %c0_i32_0 = arith.constant 0 : i32
    %c0_i32_1 = arith.constant 0 : i32
    return %c0_i32, %c0_i32_0 : i32, i32
  }
  func.func @transform_2(%arg0: i32) -> (i32, i32) {
    %c0_i32 = arith.constant 0 : i32
    %c0_i32_0 = arith.constant 0 : i32
    %c0_i32_1 = arith.constant 0 : i32
    return %c0_i32, %c0_i32_0 : i32, i32
  }
  func.func @transform_3(%arg0: i32) -> (i32, i32) {
    %c0_i32 = arith.constant 0 : i32
    %c0_i32_0 = arith.constant 0 : i32
    return %arg0, %c0_i32 : i32, i32
  }
}

</mosaic_0001>

<llo_original>
// kernel: tile.13
$region0: #{tile.13}
  #allocation0 [shape = 's32[1]{0}', space=sflag, size = 0x4, scoped, tag = 'scoped memory for tile.13']
  %s0 = inlined_call_operand.vmem [shape: f32[8], index: 0, kind: input, shape index: {}]
  %s1 = inlined_call_operand.vmem [shape: f32[16,8], index: 1, kind: output, shape index: {}]
  // Predicated region
  $region2: #{tile.13} parent=0 // pred_check
    _
  $region3: #{tile.13} parent=0 // pred_check_branch
    %3 = sbr.rel (0) target = $region5
  $region4: #{tile.13} parent=0 // pred_region
    _
  $region5: #{tile.13} parent=0 // pred_fallthru
    _
  %v4 = vld [vmem:[%s0] ss:$0 sm:$0xff]
  %5 = vst [vmem:[%s1] sm:$0xff] %v4
  %s6 = scalar_lea.vmem %s1, 8
  %7 = vst [vmem:[%s6] sm:$0xff] %v4

// kernel: tile.14
$region0: #{tile.14}
  %s0 = inlined_call_operand.vmem [shape: f32[16,8], index: 0, kind: input, shape index: {}]
  %s1 = inlined_call_operand.vmem [shape: f32[1,128], index: 1, kind: output, shape index: {}]
  $region1: #{tile.14} parent=0
    #allocation0 [shape = 'u8[4096]{0}', space=vmem, size = 0x1000, scoped, tag = 'scoped mem for output reshape']
    %v2 = vld [vmem:[%s0] sm:$0x1]
    %vm3 = vcmask 64512
    %4 = vst.msk [vmem:[#allocation0] sm:$0x1] %vm3, %v2
    %s5 = scalar_lea.vmem %s0, 15
    %v6 = vld [vmem:[%s5] sm:$0x1]
    %7 = vrot.lane.b32.xlu0 %v6, 120
    %v8 = vpop.permute.xlu0 %7
    %vm9 = vcmask 1048512
    %10 = vst.msk [vmem:[#allocation0] sm:$0x1] %vm9, %v8
    %s11 = scalar_lea.vmem %s0, 14
    %v12 = vld [vmem:[%s11] sm:$0x1]
    %13 = vrot.lane.b32.xlu0 %v12, 112
    %v14 = vpop.permute.xlu0 %13
    %vm15 = vcmask 982912
    %16 = vst.msk [vmem:[#allocation0] sm:$0x1] %vm15, %v14
    %s17 = scalar_lea.vmem %s0, 13
    %v18 = vld [vmem:[%s17] sm:$0x1]
    %19 = vrot.lane.b32.xlu0 %v18, 104
    %v20 = vpop.permute.xlu0 %19
    %vm21 = vcmask 917312
    %22 = vst.msk [vmem:[#allocation0] sm:$0x1] %vm21, %v20
    %s23 = scalar_lea.vmem %s0, 12
    %v24 = vld [vmem:[%s23] sm:$0x1]
    %25 = vrot.lane.b32.xlu0 %v24, 96
    %v26 = vpop.permute.xlu0 %25
    %vm27 = vcmask 851712
    %28 = vst.msk [vmem:[#allocation0] sm:$0x1] %vm27, %v26
    %s29 = scalar_lea.vmem %s0, 11
    %v30 = vld [vmem:[%s29] sm:$0x1]
    %31 = vrot.lane.b32.xlu0 %v30, 88
    %v32 = vpop.permute.xlu0 %31
    %vm33 = vcmask 786112
    %34 = vst.msk [vmem:[#allocation0] sm:$0x1] %vm33, %v32
    %s35 = scalar_lea.vmem %s0, 10
    %v36 = vld [vmem:[%s35] sm:$0x1]
    %37 = vrot.lane.b32.xlu0 %v36, 80
    %v38 = vpop.permute.xlu0 %37
    %vm39 = vcmask 720512
    %40 = vst.msk [vmem:[#allocation0] sm:$0x1] %vm39, %v38
    %s41 = scalar_lea.vmem %s0, 9
    %v42 = vld [vmem:[%s41] sm:$0x1]
    %43 = vrot.lane.b32.xlu0 %v42, 72
    %v44 = vpop.permute.xlu0 %43
    %vm45 = vcmask 654912
    %46 = vst.msk [vmem:[#allocation0] sm:$0x1] %vm45, %v44
    %s47 = scalar_lea.vmem %s0, 8
    %v48 = vld [vmem:[%s47] sm:$0x1]
    %49 = vrot.lane.b32.xlu0 %v48, 64
    %v50 = vpop.permute.xlu0 %49
    %vm51 = vcmask 589312
    %52 = vst.msk [vmem:[#allocation0] sm:$0x1] %vm51, %v50
    %s53 = scalar_lea.vmem %s0, 7
    %v54 = vld [vmem:[%s53] sm:$0x1]
    %55 = vrot.lane.b32.xlu0 %v54, 56
    %v56 = vpop.permute.xlu0 %55
    %vm57 = vcmask 523712
    %58 = vst.msk [vmem:[#allocation0] sm:$0x1] %vm57, %v56
    %s59 = scalar_lea.vmem %s0, 6
    %v60 = vld [vmem:[%s59] sm:$0x1]
    %61 = vrot.lane.b32.xlu0 %v60, 48
    %v62 = vpop.permute.xlu0 %61
    %vm63 = vcmask 458112
    %64 = vst.msk [vmem:[#allocation0] sm:$0x1] %vm63, %v62
    %s65 = scalar_lea.vmem %s0, 5
    %v66 = vld [vmem:[%s65] sm:$0x1]
    %67 = vrot.lane.b32.xlu0 %v66, 40
    %v68 = vpop.permute.xlu0 %67
    %vm69 = vcmask 392512
    %70 = vst.msk [vmem:[#allocation0] sm:$0x1] %vm69, %v68
    %s71 = scalar_lea.vmem %s0, 4
    %v72 = vld [vmem:[%s71] sm:$0x1]
    %73 = vrot.lane.b32.xlu0 %v72, 32
    %v74 = vpop.permute.xlu0 %73
    %vm75 = vcmask 326912
    %76 = vst.msk [vmem:[#allocation0] sm:$0x1] %vm75, %v74
    %s77 = scalar_lea.vmem %s0, 3
    %v78 = vld [vmem:[%s77] sm:$0x1]
    %79 = vrot.lane.b32.xlu0 %v78, 24
    %v80 = vpop.permute.xlu0 %79
    %vm81 = vcmask 261312
    %82 = vst.msk [vmem:[#allocation0] sm:$0x1] %vm81, %v80
    %s83 = scalar_lea.vmem %s0, 2
    %v84 = vld [vmem:[%s83] sm:$0x1]
    %85 = vrot.lane.b32.xlu0 %v84, 16
    %v86 = vpop.permute.xlu0 %85
    %vm87 = vcmask 195712
    %88 = vst.msk [vmem:[#allocation0] sm:$0x1] %vm87, %v86
    %s89 = scalar_lea.vmem %s0, 1
    %v90 = vld [vmem:[%s89] sm:$0x1]
    %91 = vrot.lane.b32.xlu0 %v90, 8
    %v92 = vpop.permute.xlu0 %91
    %vm93 = vcmask 130112
    %94 = vst.msk [vmem:[#allocation0] sm:$0x1] %vm93, %v92
    %s96 = ssub.s32 2, 1
    %v97 = vld [vmem:[#allocation0] sm:%s96]
    %s99 = ssub.s32 2, 1
    %100 = vst [vmem:[%s1] sm:%s99] %v97

// kernel: convolutional_forward.3
$region0: #{convolutional_forward.3}
  #allocation0 [shape = 'u32[]', space=smem, size = 0x4, offset = 0x4, fixed_abs, tag = 'smem constant byte address 0x4 - core index']
  #allocation1 [shape = 'u32[72,128]{1,0:T(1,128)}', space=vmem, size = 0x9000, scoped, tag = 'internal scratch']
  %s0 = inlined_call_operand.vmem [shape: bf16[32,128], index: 0, kind: input, shape index: {}]
  %s1 = inlined_call_operand.vmem [shape: f32[1,128], index: 1, kind: input, shape index: {}]
  %s2 = inlined_call_operand.vmem [shape: f32[1,128], index: 2, kind: input, shape index: {}]
  %s3 = inlined_call_operand.vmem [shape: f32[32,128], index: 3, kind: output, shape index: {}]
  %s4 = sld [smem:[#allocation0]]
  $region22: #{convolutional_forward.3} parent=0
    _
  %s6 = ssub.s32 1, %s4
  %s7 = scalar_select 0, %s6, %s4
  // Predicated region
  $region2: #{convolutional_forward.3} parent=0 // pred_check
    _
  $region3: #{convolutional_forward.3} parent=0 // pred_check_branch
    %9 = sbr.rel (0) target = $region5
  $region4: #{convolutional_forward.3} parent=0 // pred_region
    _
  $region5: #{convolutional_forward.3} parent=0 // pred_fallthru
    _
  // Predicated region
  $region6: #{convolutional_forward.3} parent=0 // pred_check
    _
  $region7: #{convolutional_forward.3} parent=0 // pred_check_branch
    %11 = sbr.rel (0) target = $region9
  $region8: #{convolutional_forward.3} parent=0 // pred_region
    _
  $region9: #{convolutional_forward.3} parent=0 // pred_fallthru
    _
  // Predicated region
  $region10: #{convolutional_forward.3} parent=0 // pred_check
    _
  $region11: #{convolutional_forward.3} parent=0 // pred_check_branch
    %13 = sbr.rel (0) target = $region13
  $region12: #{convolutional_forward.3} parent=0 // pred_region
    _
  $region13: #{convolutional_forward.3} parent=0 // pred_fallthru
    _
  %v14 = vld [vmem:[%s0] sm:$0xf]
  %v15 = vld [vmem:[%s0 + $0x4] sm:$0xf]
  %v16 = vld [vmem:[%s0 + $0x8] sm:$0xf]
  %v17 = vld [vmem:[%s0 + $0xc] sm:$0xf]
  %v18 = vunpack.c.l.bf16 %v14
  %v19 = vunpack.c.l.bf16 %v15
  %v20 = vunpack.c.l.bf16 %v16
  %v21 = vunpack.c.l.bf16 %v17
  %v22 = vld [vmem:[%s1] sm:$0x1]
  %v24 = vperm.slane %v22, 0
  %v26 = vmul.f32 %v18, %v24
  %v27 = vmul.f32 %v19, %v24
  %v28 = vmul.f32 %v20, %v24
  %v29 = vmul.f32 %v21, %v24
  %v30 = vld [vmem:[%s2] sm:$0x1]
  %v32 = vperm.slane %v30, 0
  %v34 = vadd.f32 %v26, %v32
  %v35 = vadd.f32 %v27, %v32
  %v36 = vadd.f32 %v28, %v32
  %v37 = vadd.f32 %v29, %v32
  %vm38 = vcmp.gt.f32.partialorder %v34, 0.0
  %vm39 = vcmp.gt.f32.partialorder %v35, 0.0
  %vm40 = vcmp.gt.f32.partialorder %v36, 0.0
  %vm41 = vcmp.gt.f32.partialorder %v37, 0.0
  %v42 = vmul.f32 %v34, 0.1
  %v43 = vmul.f32 %v35, 0.1
  %v44 = vmul.f32 %v36, 0.1
  %v45 = vmul.f32 %v37, 0.1
  %v46 = vsel %vm38, %v34, %v42
  %v47 = vsel %vm39, %v35, %v43
  %v48 = vsel %vm40, %v36, %v44
  %v49 = vsel %vm41, %v37, %v45
  %50 = vst [vmem:[%s3] sm:$0xff] %v46
  %51 = vst [vmem:[%s3 + $0x8] sm:$0xff] %v47
  %52 = vst [vmem:[%s3 + $0x10] sm:$0xff] %v48
  %53 = vst [vmem:[%s3 + $0x18] sm:$0xff] %v49
  // Predicated region
  $region14: #{convolutional_forward.3} parent=0 // pred_check
    _
  $region15: #{convolutional_forward.3} parent=0 // pred_check_branch
    %55 = sbr.rel (0) target = $region17
  $region16: #{convolutional_forward.3} parent=0 // pred_region
    _
  $region17: #{convolutional_forward.3} parent=0 // pred_fallthru
    _
  // Predicated region
  $region18: #{convolutional_forward.3} parent=0 // pred_check
    _
  $region19: #{convolutional_forward.3} parent=0 // pred_check_branch
    %57 = sbr.rel (0) target = $region21
  $region20: #{convolutional_forward.3} parent=0 // pred_region
    _
  $region21: #{convolutional_forward.3} parent=0 // pred_fallthru
    _

// kernel: convolutional_forward.2
$region0: #{convolutional_forward.2}
  #allocation0 [shape = 'u32[]', space=smem, size = 0x4, offset = 0x4, fixed_abs, tag = 'smem constant byte address 0x4 - core index']
  #allocation1 [shape = 'u32[72,128]{1,0:T(1,128)}', space=vmem, size = 0x9000, scoped, tag = 'internal scratch']
  #allocation2 [shape = 'bf16[8,16,36]{2,1,0:T(8,128)(2,1)}', space=vmem, size = 0x8000, scoped, tag = 'scratch operand']
  %s0 = inlined_call_operand.vmem [shape: bf16[2,2,10,18,4], index: 0, kind: input, shape index: {}]
  %s1 = inlined_call_operand.vmem [shape: bf16[36,8], index: 1, kind: input, shape index: {}]
  %s2 = inlined_call_operand.vmem [shape: bf16[2,2,128,8], index: 2, kind: output, shape index: {0}]
  %s3 = inlined_call_operand.vmem [shape: f32[2,2,1,8], index: 3, kind: output, shape index: {1}]
  %s4 = inlined_call_operand.vmem [shape: f32[2,2,1,8], index: 4, kind: output, shape index: {2}]
  %5 = xla_tuple %s2, %s3, %s4
  %s6 = sld [smem:[#allocation0]]
  $region57: #{convolutional_forward.2} parent=0
    _
  %s8 = ssub.s32 1, %s6
  %s9 = scalar_select 0, %s8, %s6
  loop: start=0, step=1, limit=6
  $region2: #{convolutional_forward.2} parent=0 // loop_pre_header
    _
  $region3: #{convolutional_forward.2} parent=0 // loop_header
    %s11 = sphi 0, %s15
    %p12 = scmp.ge.s32.totalorder %s11, 6
    %s18 = sphi 0, %s30
    %s19 = sphi 0, %s26
    %s20 = sphi 0, %s18
    %s21 = sphi 0, %s19
    %s22 = sphi 0, %s20
    %s23 = sphi 0, %s21
    %s35 = sphi 0, %s37
    %s38 = sphi 0, %s35
    %s39 = sphi 0, %s38
    %s55 = sphi 0, %s39
    %s59 = sphi 0, %s59
    %s61 = sphi 0, %s59
    %s62 = sphi 0, %s61
    %s76 = sphi 0, %s62
    %s84 = sphi 0, %s86
    %s87 = sphi 0, %s84
    %s88 = sphi 0, %s87
    %s104 = sphi 0, %s88
    %s112 = sphi 0, %s114
    %s115 = sphi 0, %s112
    %s116 = sphi 0, %s115
    %s132 = sphi 0, %s116
    %s140 = sphi 0, %s142
    %s143 = sphi 0, %s140
    %s144 = sphi 0, %s143
    %s160 = sphi 0, %s144
  $region4: #{convolutional_forward.2} parent=0 // loop_header_branch
    %14 = sbr.rel (%p12) target = $region8
  $region5: #{convolutional_forward.2} parent=0 // loop_body
    %s16 = ssub.s32 %s11, 1
    %s17 = ssub.s32 %s11, 2
    %s24 = sadd.s32 1, %s19
    %p25 = scmp.ge.s32.totalorder %s24, 2
    %s26 = scalar_select %p25, 0, %s24
    %s27 = sadd.s32 1, %s18
    %s28 = scalar_select %p25, %s27, %s18
    %p29 = scmp.ge.s32.totalorder %s28, 2
    %s30 = scalar_select %p29, 0, %s28
    %s31 = ssub.s32 %s18, %s30
    %s32 = ssub.s32 %s19, %s26
    %s33 = sor.u32 %s31, %s32
    %p34 = scmp.eq.s32.totalorder %s33, 0
    %s36 = sadd.s32 %s35, 1
    %s37 = scalar_select %p34, %s35, %s36
    %p40 = pneg %p34
    %p41 = scmp.eq.s32.totalorder %s11, 3
    %p42 = por %p40, %p41
    %p43 = scmp.ne.s32.totalorder %s35, %s38
    %p44 = scmp.eq.s32.totalorder %s11, 0
    %p45 = por %p43, %p44
    %p46 = scmp.ne.s32.totalorder %s35, %s38
    %p47 = scmp.eq.s32.totalorder %s16, 3
    %p48 = por %p46, %p47
    %p49 = scmp.ne.s32.totalorder %s38, %s39
    %p50 = scmp.eq.s32.totalorder %s16, 0
    %p51 = por %p49, %p50
    %p52 = scmp.ne.s32.totalorder %s38, %s39
    %p53 = scmp.eq.s32.totalorder %s17, 3
    %p54 = por %p52, %p53
    %p56 = scmp.ne.s32.totalorder %s39, %s55
    %p57 = scmp.eq.s32.totalorder %s17, 0
    %p58 = por %p56, %p57
    %s60 = sadd.s32 %s59, 1
    %p63 = scmp.eq.s32.totalorder %s11, 3
    %p64 = scmp.ne.s32.totalorder %s59, %s61
    %p65 = scmp.eq.s32.totalorder %s11, 0
    %p66 = por %p64, %p65
    %p67 = scmp.ne.s32.totalorder %s59, %s61
    %p68 = scmp.eq.s32.totalorder %s16, 3
    %p69 = por %p67, %p68
    %p70 = scmp.ne.s32.totalorder %s61, %s62
    %p71 = scmp.eq.s32.totalorder %s16, 0
    %p72 = por %p70, %p71
    %p73 = scmp.ne.s32.totalorder %s61, %s62
    %p74 = scmp.eq.s32.totalorder %s17, 3
    %p75 = por %p73, %p74
    %p77 = scmp.ne.s32.totalorder %s62, %s76
    %p78 = scmp.eq.s32.totalorder %s17, 0
    %p79 = por %p77, %p78
    %s80 = ssub.s32 %s18, %s30
    %s81 = ssub.s32 %s19, %s26
    %s82 = sor.u32 %s80, %s81
    %p83 = scmp.eq.s32.totalorder %s82, 0
    %s85 = sadd.s32 %s84, 1
    %s86 = scalar_select %p83, %s84, %s85
    %p89 = pneg %p83
    %p90 = scmp.eq.s32.totalorder %s11, 3
    %p91 = por %p89, %p90
    %p92 = scmp.ne.s32.totalorder %s84, %s87
    %p93 = scmp.eq.s32.totalorder %s11, 0
    %p94 = por %p92, %p93
    %p95 = scmp.ne.s32.totalorder %s84, %s87
    %p96 = scmp.eq.s32.totalorder %s16, 3
    %p97 = por %p95, %p96
    %p98 = scmp.ne.s32.totalorder %s87, %s88
    %p99 = scmp.eq.s32.totalorder %s16, 0
    %p100 = por %p98, %p99
    %p101 = scmp.ne.s32.totalorder %s87, %s88
    %p102 = scmp.eq.s32.totalorder %s17, 3
    %p103 = por %p101, %p102
    %p105 = scmp.ne.s32.totalorder %s88, %s104
    %p106 = scmp.eq.s32.totalorder %s17, 0
    %p107 = por %p105, %p106
    %s108 = ssub.s32 %s18, %s30
    %s109 = ssub.s32 %s19, %s26
    %s110 = sor.u32 %s108, %s109
    %p111 = scmp.eq.s32.totalorder %s110, 0
    %s113 = sadd.s32 %s112, 1
    %s114 = scalar_select %p111, %s112, %s113
    %p117 = pneg %p111
    %p118 = scmp.eq.s32.totalorder %s11, 3
    %p119 = por %p117, %p118
    %p120 = scmp.ne.s32.totalorder %s112, %s115
    %p121 = scmp.eq.s32.totalorder %s11, 0
    %p122 = por %p120, %p121
    %p123 = scmp.ne.s32.totalorder %s112, %s115
    %p124 = scmp.eq.s32.totalorder %s16, 3
    %p125 = por %p123, %p124
    %p126 = scmp.ne.s32.totalorder %s115, %s116
    %p127 = scmp.eq.s32.totalorder %s16, 0
    %p128 = por %p126, %p127
    %p129 = scmp.ne.s32.totalorder %s115, %s116
    %p130 = scmp.eq.s32.totalorder %s17, 3
    %p131 = por %p129, %p130
    %p133 = scmp.ne.s32.totalorder %s116, %s132
    %p134 = scmp.eq.s32.totalorder %s17, 0
    %p135 = por %p133, %p134
    %s136 = ssub.s32 %s18, %s30
    %s137 = ssub.s32 %s19, %s26
    %s138 = sor.u32 %s136, %s137
    %p139 = scmp.eq.s32.totalorder %s138, 0
    %s141 = sadd.s32 %s140, 1
    %s142 = scalar_select %p139, %s140, %s141
    %p145 = pneg %p139
    %p146 = scmp.eq.s32.totalorder %s11, 3
    %p147 = por %p145, %p146
    %p148 = scmp.ne.s32.totalorder %s140, %s143
    %p149 = scmp.eq.s32.totalorder %s11, 0
    %p150 = por %p148, %p149
    %p151 = scmp.ne.s32.totalorder %s140, %s143
    %p152 = scmp.eq.s32.totalorder %s16, 3
    %p153 = por %p151, %p152
    %p154 = scmp.ne.s32.totalorder %s143, %s144
    %p155 = scmp.eq.s32.totalorder %s16, 0
    %p156 = por %p154, %p155
    %p157 = scmp.ne.s32.totalorder %s143, %s144
    %p158 = scmp.eq.s32.totalorder %s17, 3
    %p159 = por %p157, %p158
    %p161 = scmp.ne.s32.totalorder %s144, %s160
    %p162 = scmp.eq.s32.totalorder %s17, 0
    %p163 = por %p161, %p162
    %p164 = scmp.le.s32.totalorder 1, %s11
    %p165 = scmp.lt.s32.totalorder %s11, 5
    %p166 = pnand %p164, %p165
    %p167 = pneg %p166
    // Predicated region
    $region9: #{convolutional_forward.2} parent=5 // pred_check
      _
    $region10: #{convolutional_forward.2} parent=5 // pred_check_branch
      %169 = sbr.rel (%p166) target = $region12
    $region11: #{convolutional_forward.2} parent=5 // pred_region
      %s170 = ssub.s32 %s11, 1
      // Predicated region
      $region13: #{convolutional_forward.2} parent=11 // pred_check
        %p171 = pneg %p72
      $region14: #{convolutional_forward.2} parent=11 // pred_check_branch
        %173 = sbr.rel (%p171) target = $region16
      $region15: #{convolutional_forward.2} parent=11 // pred_region
        _
      $region16: #{convolutional_forward.2} parent=11 // pred_fallthru
        _
    $region12: #{convolutional_forward.2} parent=5 // pred_fallthru
      _
    %p174 = scmp.lt.s32.totalorder %s11, 4
    // Predicated region
    $region17: #{convolutional_forward.2} parent=5 // pred_check
      %p175 = pneg %p174
    $region18: #{convolutional_forward.2} parent=5 // pred_check_branch
      %177 = sbr.rel (%p175) target = $region20
    $region19: #{convolutional_forward.2} parent=5 // pred_region
      // Predicated region
      $region21: #{convolutional_forward.2} parent=19 // pred_check
        %p178 = pneg %p45
      $region22: #{convolutional_forward.2} parent=19 // pred_check_branch
        %180 = sbr.rel (%p178) target = $region24
      $region23: #{convolutional_forward.2} parent=19 // pred_region
        %p181 = scmp.lt.s32.totalorder %s18, 1
        %s182 = scalar_select %p181, %s18, 1
        %p183 = scmp.lt.s32.totalorder %s19, 1
        %s184 = scalar_select %p183, %s19, 1
        %s185 = smul.addr %s184, 30
        %s186 = smul.addr %s182, 60
        %s187 = sadd.s32 %s185, %s186
        %s188 = smul.addr %s187, 4
        %s189 = scalar_lea.vmem %s0, %s188
      $region24: #{convolutional_forward.2} parent=19 // pred_fallthru
        _
    $region20: #{convolutional_forward.2} parent=5 // pred_fallthru
      _
    %p190 = scmp.le.s32.totalorder 1, %s11
    %p191 = scmp.lt.s32.totalorder %s11, 5
    %p192 = pnand %p190, %p191
    %p193 = pneg %p192
    // Predicated region
    $region25: #{convolutional_forward.2} parent=5 // pred_check
      _
    $region26: #{convolutional_forward.2} parent=5 // pred_check_branch
      %195 = sbr.rel (%p192) target = $region28
    $region27: #{convolutional_forward.2} parent=5 // pred_region
      %s196 = ssub.s32 %s11, 1
      %p197 = scmp.lt.s32.totalorder %s20, 1
      %s198 = scalar_select %p197, %s20, 1
      %p199 = scmp.lt.s32.totalorder %s21, 1
      %s200 = scalar_select %p199, %s21, 1
      %s201 = smul.addr %s200, 30
      %s202 = smul.addr %s198, 60
      %s203 = sadd.s32 %s201, %s202
      %s204 = smul.addr %s203, 4
      %s205 = scalar_lea.vmem %s0, %s204
      %p206 = pneg %p51
      %p207 = pneg %p48
      %p208 = pneg %p72
      %p209 = pneg %p69
      %p210 = pneg %p100
      %p211 = pneg %p97
      %p212 = scmp.lt.s32.totalorder %s20, 1
      %s213 = scalar_select %p212, %s20, 1
      %p214 = scmp.lt.s32.totalorder %s21, 1
      %s215 = scalar_select %p214, %s21, 1
      %s216 = smul.addr %s215, 16
      %s217 = smul.addr %s213, 32
      %s218 = sadd.s32 %s216, %s217
      %s219 = smul.addr %s218, 4
      %s220 = scalar_lea.vmem %s2, %s219
      %p221 = pneg %p128
      %p222 = pneg %p125
      %p223 = scmp.lt.s32.totalorder %s20, 1
      %s224 = scalar_select %p223, %s20, 1
      %p225 = scmp.lt.s32.totalorder %s21, 1
      %s226 = scalar_select %p225, %s21, 1
      %s227 = smul.addr %s224, 2
      %s228 = sadd.s32 %s226, %s227
      %s229 = scalar_lea.vmem %s3, %s228
      %p230 = pneg %p156
      %p231 = pneg %p153
      %p232 = scmp.lt.s32.totalorder %s20, 1
      %s233 = scalar_select %p232, %s20, 1
      %p234 = scmp.lt.s32.totalorder %s21, 1
      %s235 = scalar_select %p234, %s21, 1
      %s236 = smul.addr %s233, 2
      %s237 = sadd.s32 %s235, %s236
      %s238 = scalar_lea.vmem %s4, %s237
      %p239 = scmp.lt.s32.totalorder %s20, 1
      %s240 = scalar_select %p239, %s20, 1
      %p241 = scmp.lt.s32.totalorder %s21, 1
      %s242 = scalar_select %p241, %s21, 1
      %s243 = smul.addr %s242, 30
      %s244 = smul.addr %s240, 60
      %s245 = sadd.s32 %s243, %s244
      %s246 = smul.addr %s245, 4
      %s247 = scalar_lea.vmem %s0, %s246
      %p248 = scmp.lt.s32.totalorder %s20, 1
      %s249 = scalar_select %p248, %s20, 1
      %p250 = scmp.lt.s32.totalorder %s21, 1
      %s251 = scalar_select %p250, %s21, 1
      %s252 = smul.addr %s251, 16
      %s253 = smul.addr %s249, 32
      %s254 = sadd.s32 %s252, %s253
      %s255 = smul.addr %s254, 4
      %s256 = scalar_lea.vmem %s2, %s255
      %p257 = scmp.lt.s32.totalorder %s20, 1
      %s258 = scalar_select %p257, %s20, 1
      %p259 = scmp.lt.s32.totalorder %s21, 1
      %s260 = scalar_select %p259, %s21, 1
      %s261 = smul.addr %s258, 2
      %s262 = sadd.s32 %s260, %s261
      %s263 = scalar_lea.vmem %s3, %s262
      %p264 = scmp.lt.s32.totalorder %s20, 1
      %s265 = scalar_select %p264, %s20, 1
      %p266 = scmp.lt.s32.totalorder %s21, 1
      %s267 = scalar_select %p266, %s21, 1
      %s268 = smul.addr %s265, 2
      %s269 = sadd.s32 %s267, %s268
      %s270 = scalar_lea.vmem %s4, %s269
      %v272 = vld [vmem:[%s247] sm:$0xf]
      %v273 = vld [vmem:[%s247 + $0x4] sm:$0xf]
      %v274 = vld [vmem:[%s247 + $0xc] sm:$0xf]
      %v275 = vld [vmem:[%s247 + $0x10] sm:$0xf]
      %v276 = vld [vmem:[%s247 + $0x18] sm:$0xf]
      %v277 = vld [vmem:[%s247 + $0x1c] sm:$0xf]
      %v278 = vld [vmem:[%s247 + $0x24] sm:$0xf]
      %v279 = vld [vmem:[%s247 + $0x28] sm:$0xf]
      %v280 = vld [vmem:[%s247 + $0x30] sm:$0xf]
      %v281 = vld [vmem:[%s247 + $0x34] sm:$0xf]
      %v282 = vld [vmem:[%s247 + $0x3c] sm:$0xf]
      %v283 = vld [vmem:[%s247 + $0x40] sm:$0xf]
      %v284 = vld [vmem:[%s247 + $0x48] sm:$0xf]
      %v285 = vld [vmem:[%s247 + $0x4c] sm:$0xf]
      %v286 = vld [vmem:[%s247 + $0x54] sm:$0xf]
      %v287 = vld [vmem:[%s247 + $0x58] sm:$0xf]
      %vm288 = vcmask 27648
      %289 = vst.msk [vmem:[#allocation2] sm:$0xf] %vm288, %v272
      %290 = vst.msk [vmem:[#allocation2 + $0x4] sm:$0xf] %vm288, %v273
      %291 = vst.msk [vmem:[#allocation2 + $0x8] sm:$0xf] %vm288, %v274
      %292 = vst.msk [vmem:[#allocation2 + $0xc] sm:$0xf] %vm288, %v275
      %293 = vst.msk [vmem:[#allocation2 + $0x10] sm:$0xf] %vm288, %v276
      %294 = vst.msk [vmem:[#allocation2 + $0x14] sm:$0xf] %vm288, %v277
      %295 = vst.msk [vmem:[#allocation2 + $0x18] sm:$0xf] %vm288, %v278
      %296 = vst.msk [vmem:[#allocation2 + $0x1c] sm:$0xf] %vm288, %v279
      %297 = vst.msk [vmem:[#allocation2 + $0x20] sm:$0xf] %vm288, %v280
      %298 = vst.msk [vmem:[#allocation2 + $0x24] sm:$0xf] %vm288, %v281
      %299 = vst.msk [vmem:[#allocation2 + $0x28] sm:$0xf] %vm288, %v282
      %300 = vst.msk [vmem:[#allocation2 + $0x2c] sm:$0xf] %vm288, %v283
      %301 = vst.msk [vmem:[#allocation2 + $0x30] sm:$0xf] %vm288, %v284
      %302 = vst.msk [vmem:[#allocation2 + $0x34] sm:$0xf] %vm288, %v285
      %303 = vst.msk [vmem:[#allocation2 + $0x38] sm:$0xf] %vm288, %v286
      %304 = vst.msk [vmem:[#allocation2 + $0x3c] sm:$0xf] %vm288, %v287
      %v305 = vld [vmem:[%s247] sm:$0xf]
      %v306 = vld [vmem:[%s247 + $0x4] sm:$0xf]
      %v307 = vld [vmem:[%s247 + $0x8] sm:$0x1]
      %v308 = vld [vmem:[%s247 + $0xc] sm:$0xf]
      %v309 = vld [vmem:[%s247 + $0x10] sm:$0xf]
      %v310 = vld [vmem:[%s247 + $0x14] sm:$0x1]
      %v311 = vld [vmem:[%s247 + $0x18] sm:$0xf]
      %v312 = vld [vmem:[%s247 + $0x1c] sm:$0xf]
      %v313 = vld [vmem:[%s247 + $0x20] sm:$0x1]
      %v314 = vld [vmem:[%s247 + $0x24] sm:$0xf]
      %v315 = vld [vmem:[%s247 + $0x28] sm:$0xf]
      %v316 = vld [vmem:[%s247 + $0x2c] sm:$0x1]
      %v317 = vld [vmem:[%s247 + $0x30] sm:$0xf]
      %v318 = vld [vmem:[%s247 + $0x34] sm:$0xf]
      %v319 = vld [vmem:[%s247 + $0x38] sm:$0x1]
      %v320 = vld [vmem:[%s247 + $0x3c] sm:$0xf]
      %v321 = vld [vmem:[%s247 + $0x40] sm:$0xf]
      %v322 = vld [vmem:[%s247 + $0x44] sm:$0x1]
      %v323 = vld [vmem:[%s247 + $0x48] sm:$0xf]
      %v324 = vld [vmem:[%s247 + $0x4c] sm:$0xf]
      %v325 = vld [vmem:[%s247 + $0x50] sm:$0x1]
      %v326 = vld [vmem:[%s247 + $0x54] sm:$0xf]
      %v327 = vld [vmem:[%s247 + $0x58] sm:$0xf]
      %v328 = vld [vmem:[%s247 + $0x5c] sm:$0x1]
      %vm329 = vsmask.f32 3328
      %vm330 = vsmask.f32 7440
      %vm331 = vmor %vm329, %vm330
      %v333 = vshrl.u32 %v305, 16
      %v335 = vrot.slane %v333, 4
      %v336 = vshll.u32 %v305, 16
      %v338 = vrot.slane %v336, 5
      %v339 = vor.u32 %v335, %v338
      %v340 = vrot.slane %v339, 4
      %v342 = vshll.u32 %v306, 16
      %v344 = vrot.slane %v342, 5
      %v345 = vsel %vm331, %v340, %v344
      %v346 = vshrl.u32 %v306, 16
      %v348 = vrot.slane %v346, 4
      %v349 = vor.u32 %v348, %v344
      %v350 = vrot.slane %v349, 4
      %v352 = vshll.u32 %v307, 16
      %v354 = vrot.slane %v352, 5
      %v355 = vsel %vm331, %v350, %v354
      %v357 = vshrl.u32 %v308, 16
      %v359 = vrot.slane %v357, 4
      %v360 = vshll.u32 %v308, 16
      %v362 = vrot.slane %v360, 5
      %v363 = vor.u32 %v359, %v362
      %v364 = vrot.slane %v363, 4
      %v366 = vshll.u32 %v309, 16
      %v368 = vrot.slane %v366, 5
      %v369 = vsel %vm331, %v364, %v368
      %v370 = vshrl.u32 %v309, 16
      %v372 = vrot.slane %v370, 4
      %v373 = vor.u32 %v372, %v368
      %v374 = vrot.slane %v373, 4
      %v376 = vshll.u32 %v310, 16
      %v378 = vrot.slane %v376, 5
      %v379 = vsel %vm331, %v374, %v378
      %v381 = vshrl.u32 %v311, 16
      %v383 = vrot.slane %v381, 4
      %v384 = vshll.u32 %v311, 16
      %v386 = vrot.slane %v384, 5
      %v387 = vor.u32 %v383, %v386
      %v388 = vrot.slane %v387, 4
      %v390 = vshll.u32 %v312, 16
      %v392 = vrot.slane %v390, 5
      %v393 = vsel %vm331, %v388, %v392
      %v394 = vshrl.u32 %v312, 16
      %v396 = vrot.slane %v394, 4
      %v397 = vor.u32 %v396, %v392
      %v398 = vrot.slane %v397, 4
      %v400 = vshll.u32 %v313, 16
      %v402 = vrot.slane %v400, 5
      %v403 = vsel %vm331, %v398, %v402
      %v405 = vshrl.u32 %v314, 16
      %v407 = vrot.slane %v405, 4
      %v408 = vshll.u32 %v314, 16
      %v410 = vrot.slane %v408, 5
      %v411 = vor.u32 %v407, %v410
      %v412 = vrot.slane %v411, 4
      %v414 = vshll.u32 %v315, 16
      %v416 = vrot.slane %v414, 5
      %v417 = vsel %vm331, %v412, %v416
      %v418 = vshrl.u32 %v315, 16
      %v420 = vrot.slane %v418, 4
      %v421 = vor.u32 %v420, %v416
      %v422 = vrot.slane %v421, 4
      %v424 = vshll.u32 %v316, 16
      %v426 = vrot.slane %v424, 5
      %v427 = vsel %vm331, %v422, %v426
      %v429 = vshrl.u32 %v317, 16
      %v431 = vrot.slane %v429, 4
      %v432 = vshll.u32 %v317, 16
      %v434 = vrot.slane %v432, 5
      %v435 = vor.u32 %v431, %v434
      %v436 = vrot.slane %v435, 4
      %v438 = vshll.u32 %v318, 16
      %v440 = vrot.slane %v438, 5
      %v441 = vsel %vm331, %v436, %v440
      %v442 = vshrl.u32 %v318, 16
      %v444 = vrot.slane %v442, 4
      %v445 = vor.u32 %v444, %v440
      %v446 = vrot.slane %v445, 4
      %v448 = vshll.u32 %v319, 16
      %v450 = vrot.slane %v448, 5
      %v451 = vsel %vm331, %v446, %v450
      %v453 = vshrl.u32 %v320, 16
      %v455 = vrot.slane %v453, 4
      %v456 = vshll.u32 %v320, 16
      %v458 = vrot.slane %v456, 5
      %v459 = vor.u32 %v455, %v458
      %v460 = vrot.slane %v459, 4
      %v462 = vshll.u32 %v321, 16
      %v464 = vrot.slane %v462, 5
      %v465 = vsel %vm331, %v460, %v464
      %v466 = vshrl.u32 %v321, 16
      %v468 = vrot.slane %v466, 4
      %v469 = vor.u32 %v468, %v464
      %v470 = vrot.slane %v469, 4
      %v472 = vshll.u32 %v322, 16
      %v474 = vrot.slane %v472, 5
      %v475 = vsel %vm331, %v470, %v474
      %v477 = vshrl.u32 %v323, 16
      %v479 = vrot.slane %v477, 4
      %v480 = vshll.u32 %v323, 16
      %v482 = vrot.slane %v480, 5
      %v483 = vor.u32 %v479, %v482
      %v484 = vrot.slane %v483, 4
      %v486 = vshll.u32 %v324, 16
      %v488 = vrot.slane %v486, 5
      %v489 = vsel %vm331, %v484, %v488
      %v490 = vshrl.u32 %v324, 16
      %v492 = vrot.slane %v490, 4
      %v493 = vor.u32 %v492, %v488
      %v494 = vrot.slane %v493, 4
      %v496 = vshll.u32 %v325, 16
      %v498 = vrot.slane %v496, 5
      %v499 = vsel %vm331, %v494, %v498
      %v501 = vshrl.u32 %v326, 16
      %v503 = vrot.slane %v501, 4
      %v504 = vshll.u32 %v326, 16
      %v506 = vrot.slane %v504, 5
      %v507 = vor.u32 %v503, %v506
      %v508 = vrot.slane %v507, 4
      %v510 = vshll.u32 %v327, 16
      %v512 = vrot.slane %v510, 5
      %v513 = vsel %vm331, %v508, %v512
      %v514 = vshrl.u32 %v327, 16
      %v516 = vrot.slane %v514, 4
      %v517 = vor.u32 %v516, %v512
      %v518 = vrot.slane %v517, 4
      %v520 = vshll.u32 %v328, 16
      %v522 = vrot.slane %v520, 5
      %v523 = vsel %vm331, %v518, %v522
      %524 = vrot.lane.b32.xlu0 %v345, 4
      %v525 = vpop.permute.xlu0 %524
      %526 = vrot.lane.b32.xlu0 %v355, 4
      %v527 = vpop.permute.xlu0 %526
      %528 = vrot.lane.b32.xlu0 %v369, 4
      %v529 = vpop.permute.xlu0 %528
      %530 = vrot.lane.b32.xlu0 %v379, 4
      %v531 = vpop.permute.xlu0 %530
      %532 = vrot.lane.b32.xlu0 %v393, 4
      %v533 = vpop.permute.xlu0 %532
      %534 = vrot.lane.b32.xlu0 %v403, 4
      %v535 = vpop.permute.xlu0 %534
      %536 = vrot.lane.b32.xlu0 %v417, 4
      %v537 = vpop.permute.xlu0 %536
      %538 = vrot.lane.b32.xlu0 %v427, 4
      %v539 = vpop.permute.xlu0 %538
      %540 = vrot.lane.b32.xlu0 %v441, 4
      %v541 = vpop.permute.xlu0 %540
      %542 = vrot.lane.b32.xlu0 %v451, 4
      %v543 = vpop.permute.xlu0 %542
      %544 = vrot.lane.b32.xlu0 %v465, 4
      %v545 = vpop.permute.xlu0 %544
      %546 = vrot.lane.b32.xlu0 %v475, 4
      %v547 = vpop.permute.xlu0 %546
      %548 = vrot.lane.b32.xlu0 %v489, 4
      %v549 = vpop.permute.xlu0 %548
      %550 = vrot.lane.b32.xlu0 %v499, 4
      %v551 = vpop.permute.xlu0 %550
      %552 = vrot.lane.b32.xlu0 %v513, 4
      %v553 = vpop.permute.xlu0 %552
      %554 = vrot.lane.b32.xlu0 %v523, 4
      %v555 = vpop.permute.xlu0 %554
      %vm572 = vcmask 60448
      %573 = vst.msk [vmem:[#allocation2] sm:$0xf] %vm572, %v525
      %574 = vst.msk [vmem:[#allocation2 + $0x4] sm:$0xf] %vm572, %v527
      %575 = vst.msk [vmem:[#allocation2 + $0x8] sm:$0xf] %vm572, %v529
      %576 = vst.msk [vmem:[#allocation2 + $0xc] sm:$0xf] %vm572, %v531
      %577 = vst.msk [vmem:[#allocation2 + $0x10] sm:$0xf] %vm572, %v533
      %578 = vst.msk [vmem:[#allocation2 + $0x14] sm:$0xf] %vm572, %v535
      %579 = vst.msk [vmem:[#allocation2 + $0x18] sm:$0xf] %vm572, %v537
      %580 = vst.msk [vmem:[#allocation2 + $0x1c] sm:$0xf] %vm572, %v539
      %581 = vst.msk [vmem:[#allocation2 + $0x20] sm:$0xf] %vm572, %v541
      %582 = vst.msk [vmem:[#allocation2 + $0x24] sm:$0xf] %vm572, %v543
      %583 = vst.msk [vmem:[#allocation2 + $0x28] sm:$0xf] %vm572, %v545
      %584 = vst.msk [vmem:[#allocation2 + $0x2c] sm:$0xf] %vm572, %v547
      %585 = vst.msk [vmem:[#allocation2 + $0x30] sm:$0xf] %vm572, %v549
      %586 = vst.msk [vmem:[#allocation2 + $0x34] sm:$0xf] %vm572, %v551
      %587 = vst.msk [vmem:[#allocation2 + $0x38] sm:$0xf] %vm572, %v553
      %588 = vst.msk [vmem:[#allocation2 + $0x3c] sm:$0xf] %vm572, %v555
      %v589 = vld [vmem:[%s247] sm:$0xe]
      %v590 = vld [vmem:[%s247 + $0x4] sm:$0xf]
      %v591 = vld [vmem:[%s247 + $0x8] sm:$0x1]
      %v592 = vld [vmem:[%s247 + $0xc] sm:$0xe]
      %v593 = vld [vmem:[%s247 + $0x10] sm:$0xf]
      %v594 = vld [vmem:[%s247 + $0x14] sm:$0x1]
      %v595 = vld [vmem:[%s247 + $0x18] sm:$0xe]
      %v596 = vld [vmem:[%s247 + $0x1c] sm:$0xf]
      %v597 = vld [vmem:[%s247 + $0x20] sm:$0x1]
      %v598 = vld [vmem:[%s247 + $0x24] sm:$0xe]
      %v599 = vld [vmem:[%s247 + $0x28] sm:$0xf]
      %v600 = vld [vmem:[%s247 + $0x2c] sm:$0x1]
      %v601 = vld [vmem:[%s247 + $0x30] sm:$0xe]
      %v602 = vld [vmem:[%s247 + $0x34] sm:$0xf]
      %v603 = vld [vmem:[%s247 + $0x38] sm:$0x1]
      %v604 = vld [vmem:[%s247 + $0x3c] sm:$0xe]
      %v605 = vld [vmem:[%s247 + $0x40] sm:$0xf]
      %v606 = vld [vmem:[%s247 + $0x44] sm:$0x1]
      %v607 = vld [vmem:[%s247 + $0x48] sm:$0xe]
      %v608 = vld [vmem:[%s247 + $0x4c] sm:$0xf]
      %v609 = vld [vmem:[%s247 + $0x50] sm:$0x1]
      %v610 = vld [vmem:[%s247 + $0x54] sm:$0xe]
      %v611 = vld [vmem:[%s247 + $0x58] sm:$0xf]
      %v612 = vld [vmem:[%s247 + $0x5c] sm:$0x1]
      %vm637 = vcmask 1042432
      %vm638 = vcmask 1046532
      %vm639 = vmor %vm637, %vm638
      %v640 = vrot.slane %v589, 5
      %v641 = vrot.slane %v640, 4
      %v642 = vrot.slane %v590, 5
      %v643 = vsel %vm639, %v641, %v642
      %v644 = vrot.slane %v642, 4
      %v645 = vrot.slane %v591, 5
      %v646 = vsel %vm639, %v644, %v645
      %v647 = vrot.slane %v592, 5
      %v648 = vrot.slane %v647, 4
      %v649 = vrot.slane %v593, 5
      %v650 = vsel %vm639, %v648, %v649
      %v651 = vrot.slane %v649, 4
      %v652 = vrot.slane %v594, 5
      %v653 = vsel %vm639, %v651, %v652
      %v654 = vrot.slane %v595, 5
      %v655 = vrot.slane %v654, 4
      %v656 = vrot.slane %v596, 5
      %v657 = vsel %vm639, %v655, %v656
      %v658 = vrot.slane %v656, 4
      %v659 = vrot.slane %v597, 5
      %v660 = vsel %vm639, %v658, %v659
      %v661 = vrot.slane %v598, 5
      %v662 = vrot.slane %v661, 4
      %v663 = vrot.slane %v599, 5
      %v664 = vsel %vm639, %v662, %v663
      %v665 = vrot.slane %v663, 4
      %v666 = vrot.slane %v600, 5
      %v667 = vsel %vm639, %v665, %v666
      %v668 = vrot.slane %v601, 5
      %v669 = vrot.slane %v668, 4
      %v670 = vrot.slane %v602, 5
      %v671 = vsel %vm639, %v669, %v670
      %v672 = vrot.slane %v670, 4
      %v673 = vrot.slane %v603, 5
      %v674 = vsel %vm639, %v672, %v673
      %v675 = vrot.slane %v604, 5
      %v676 = vrot.slane %v675, 4
      %v677 = vrot.slane %v605, 5
      %v678 = vsel %vm639, %v676, %v677
      %v679 = vrot.slane %v677, 4
      %v680 = vrot.slane %v606, 5
      %v681 = vsel %vm639, %v679, %v680
      %v682 = vrot.slane %v607, 5
      %v683 = vrot.slane %v682, 4
      %v684 = vrot.slane %v608, 5
      %v685 = vsel %vm639, %v683, %v684
      %v686 = vrot.slane %v684, 4
      %v687 = vrot.slane %v609, 5
      %v688 = vsel %vm639, %v686, %v687
      %v689 = vrot.slane %v610, 5
      %v690 = vrot.slane %v689, 4
      %v691 = vrot.slane %v611, 5
      %v692 = vsel %vm639, %v690, %v691
      %v693 = vrot.slane %v691, 4
      %v694 = vrot.slane %v612, 5
      %v695 = vsel %vm639, %v693, %v694
      %696 = vrot.lane.b32.xlu0 %v643, 8
      %v697 = vpop.permute.xlu0 %696
      %698 = vrot.lane.b32.xlu0 %v646, 8
      %v699 = vpop.permute.xlu0 %698
      %700 = vrot.lane.b32.xlu0 %v650, 8
      %v701 = vpop.permute.xlu0 %700
      %702 = vrot.lane.b32.xlu0 %v653, 8
      %v703 = vpop.permute.xlu0 %702
      %704 = vrot.lane.b32.xlu0 %v657, 8
      %v705 = vpop.permute.xlu0 %704
      %706 = vrot.lane.b32.xlu0 %v660, 8
      %v707 = vpop.permute.xlu0 %706
      %708 = vrot.lane.b32.xlu0 %v664, 8
      %v709 = vpop.permute.xlu0 %708
      %710 = vrot.lane.b32.xlu0 %v667, 8
      %v711 = vpop.permute.xlu0 %710
      %712 = vrot.lane.b32.xlu0 %v671, 8
      %v713 = vpop.permute.xlu0 %712
      %714 = vrot.lane.b32.xlu0 %v674, 8
      %v715 = vpop.permute.xlu0 %714
      %716 = vrot.lane.b32.xlu0 %v678, 8
      %v717 = vpop.permute.xlu0 %716
      %718 = vrot.lane.b32.xlu0 %v681, 8
      %v719 = vpop.permute.xlu0 %718
      %720 = vrot.lane.b32.xlu0 %v685, 8
      %v721 = vpop.permute.xlu0 %720
      %722 = vrot.lane.b32.xlu0 %v688, 8
      %v723 = vpop.permute.xlu0 %722
      %724 = vrot.lane.b32.xlu0 %v692, 8
      %v725 = vpop.permute.xlu0 %724
      %726 = vrot.lane.b32.xlu0 %v695, 8
      %v727 = vpop.permute.xlu0 %726
      %vm744 = vcmask 93248
      %745 = vst.msk [vmem:[#allocation2] sm:$0xf] %vm744, %v697
      %746 = vst.msk [vmem:[#allocation2 + $0x4] sm:$0xf] %vm744, %v699
      %747 = vst.msk [vmem:[#allocation2 + $0x8] sm:$0xf] %vm744, %v701
      %748 = vst.msk [vmem:[#allocation2 + $0xc] sm:$0xf] %vm744, %v703
      %749 = vst.msk [vmem:[#allocation2 + $0x10] sm:$0xf] %vm744, %v705
      %750 = vst.msk [vmem:[#allocation2 + $0x14] sm:$0xf] %vm744, %v707
      %751 = vst.msk [vmem:[#allocation2 + $0x18] sm:$0xf] %vm744, %v709
      %752 = vst.msk [vmem:[#allocation2 + $0x1c] sm:$0xf] %vm744, %v711
      %753 = vst.msk [vmem:[#allocation2 + $0x20] sm:$0xf] %vm744, %v713
      %754 = vst.msk [vmem:[#allocation2 + $0x24] sm:$0xf] %vm744, %v715
      %755 = vst.msk [vmem:[#allocation2 + $0x28] sm:$0xf] %vm744, %v717
      %756 = vst.msk [vmem:[#allocation2 + $0x2c] sm:$0xf] %vm744, %v719
      %757 = vst.msk [vmem:[#allocation2 + $0x30] sm:$0xf] %vm744, %v721
      %758 = vst.msk [vmem:[#allocation2 + $0x34] sm:$0xf] %vm744, %v723
      %759 = vst.msk [vmem:[#allocation2 + $0x38] sm:$0xf] %vm744, %v725
      %760 = vst.msk [vmem:[#allocation2 + $0x3c] sm:$0xf] %vm744, %v727
      %s761 = scalar_lea.vmem %s247, 12
      %v762 = vld [vmem:[%s761] sm:$0xf]
      %v763 = vld [vmem:[%s761 + $0x4] sm:$0xf]
      %v764 = vld [vmem:[%s761 + $0xc] sm:$0xf]
      %v765 = vld [vmem:[%s761 + $0x10] sm:$0xf]
      %v766 = vld [vmem:[%s761 + $0x18] sm:$0xf]
      %v767 = vld [vmem:[%s761 + $0x1c] sm:$0xf]
      %v768 = vld [vmem:[%s761 + $0x24] sm:$0xf]
      %v769 = vld [vmem:[%s761 + $0x28] sm:$0xf]
      %v770 = vld [vmem:[%s761 + $0x30] sm:$0xf]
      %v771 = vld [vmem:[%s761 + $0x34] sm:$0xf]
      %v772 = vld [vmem:[%s761 + $0x3c] sm:$0xf]
      %v773 = vld [vmem:[%s761 + $0x40] sm:$0xf]
      %v774 = vld [vmem:[%s761 + $0x48] sm:$0xf]
      %v775 = vld [vmem:[%s761 + $0x4c] sm:$0xf]
      %v776 = vld [vmem:[%s761 + $0x54] sm:$0xf]
      %v777 = vld [vmem:[%s761 + $0x58] sm:$0xf]
      %794 = vrot.lane.b32.xlu0 %v762, 12
      %v795 = vpop.permute.xlu0 %794
      %796 = vrot.lane.b32.xlu0 %v763, 12
      %v797 = vpop.permute.xlu0 %796
      %798 = vrot.lane.b32.xlu0 %v764, 12
      %v799 = vpop.permute.xlu0 %798
      %800 = vrot.lane.b32.xlu0 %v765, 12
      %v801 = vpop.permute.xlu0 %800
      %802 = vrot.lane.b32.xlu0 %v766, 12
      %v803 = vpop.permute.xlu0 %802
      %804 = vrot.lane.b32.xlu0 %v767, 12
      %v805 = vpop.permute.xlu0 %804
      %806 = vrot.lane.b32.xlu0 %v768, 12
      %v807 = vpop.permute.xlu0 %806
      %808 = vrot.lane.b32.xlu0 %v769, 12
      %v809 = vpop.permute.xlu0 %808
      %810 = vrot.lane.b32.xlu0 %v770, 12
      %v811 = vpop.permute.xlu0 %810
      %812 = vrot.lane.b32.xlu0 %v771, 12
      %v813 = vpop.permute.xlu0 %812
      %814 = vrot.lane.b32.xlu0 %v772, 12
      %v815 = vpop.permute.xlu0 %814
      %816 = vrot.lane.b32.xlu0 %v773, 12
      %v817 = vpop.permute.xlu0 %816
      %818 = vrot.lane.b32.xlu0 %v774, 12
      %v819 = vpop.permute.xlu0 %818
      %820 = vrot.lane.b32.xlu0 %v775, 12
      %v821 = vpop.permute.xlu0 %820
      %822 = vrot.lane.b32.xlu0 %v776, 12
      %v823 = vpop.permute.xlu0 %822
      %824 = vrot.lane.b32.xlu0 %v777, 12
      %v825 = vpop.permute.xlu0 %824
      %vm842 = vcmask 126048
      %843 = vst.msk [vmem:[#allocation2] sm:$0xf] %vm842, %v795
      %844 = vst.msk [vmem:[#allocation2 + $0x4] sm:$0xf] %vm842, %v797
      %845 = vst.msk [vmem:[#allocation2 + $0x8] sm:$0xf] %vm842, %v799
      %846 = vst.msk [vmem:[#allocation2 + $0xc] sm:$0xf] %vm842, %v801
      %847 = vst.msk [vmem:[#allocation2 + $0x10] sm:$0xf] %vm842, %v803
      %848 = vst.msk [vmem:[#allocation2 + $0x14] sm:$0xf] %vm842, %v805
      %849 = vst.msk [vmem:[#allocation2 + $0x18] sm:$0xf] %vm842, %v807
      %850 = vst.msk [vmem:[#allocation2 + $0x1c] sm:$0xf] %vm842, %v809
      %851 = vst.msk [vmem:[#allocation2 + $0x20] sm:$0xf] %vm842, %v811
      %852 = vst.msk [vmem:[#allocation2 + $0x24] sm:$0xf] %vm842, %v813
      %853 = vst.msk [vmem:[#allocation2 + $0x28] sm:$0xf] %vm842, %v815
      %854 = vst.msk [vmem:[#allocation2 + $0x2c] sm:$0xf] %vm842, %v817
      %855 = vst.msk [vmem:[#allocation2 + $0x30] sm:$0xf] %vm842, %v819
      %856 = vst.msk [vmem:[#allocation2 + $0x34] sm:$0xf] %vm842, %v821
      %857 = vst.msk [vmem:[#allocation2 + $0x38] sm:$0xf] %vm842, %v823
      %858 = vst.msk [vmem:[#allocation2 + $0x3c] sm:$0xf] %vm842, %v825
      %v859 = vld [vmem:[%s761] sm:$0xf]
      %v860 = vld [vmem:[%s761 + $0x4] sm:$0xf]
      %v861 = vld [vmem:[%s761 + $0x8] sm:$0x1]
      %v862 = vld [vmem:[%s761 + $0xc] sm:$0xf]
      %v863 = vld [vmem:[%s761 + $0x10] sm:$0xf]
      %v864 = vld [vmem:[%s761 + $0x14] sm:$0x1]
      %v865 = vld [vmem:[%s761 + $0x18] sm:$0xf]
      %v866 = vld [vmem:[%s761 + $0x1c] sm:$0xf]
      %v867 = vld [vmem:[%s761 + $0x20] sm:$0x1]
      %v868 = vld [vmem:[%s761 + $0x24] sm:$0xf]
      %v869 = vld [vmem:[%s761 + $0x28] sm:$0xf]
      %v870 = vld [vmem:[%s761 + $0x2c] sm:$0x1]
      %v871 = vld [vmem:[%s761 + $0x30] sm:$0xf]
      %v872 = vld [vmem:[%s761 + $0x34] sm:$0xf]
      %v873 = vld [vmem:[%s761 + $0x38] sm:$0x1]
      %v874 = vld [vmem:[%s761 + $0x3c] sm:$0xf]
      %v875 = vld [vmem:[%s761 + $0x40] sm:$0xf]
      %v876 = vld [vmem:[%s761 + $0x44] sm:$0x1]
      %v877 = vld [vmem:[%s761 + $0x48] sm:$0xf]
      %v878 = vld [vmem:[%s761 + $0x4c] sm:$0xf]
      %v879 = vld [vmem:[%s761 + $0x50] sm:$0x1]
      %v880 = vld [vmem:[%s761 + $0x54] sm:$0xf]
      %v881 = vld [vmem:[%s761 + $0x58] sm:$0xf]
      %v882 = vld [vmem:[%s761 + $0x5c] sm:$0x1]
      %v884 = vshrl.u32 %v859, 16
      %v886 = vrot.slane %v884, 4
      %v887 = vshll.u32 %v859, 16
      %v889 = vrot.slane %v887, 5
      %v890 = vor.u32 %v886, %v889
      %v891 = vrot.slane %v890, 4
      %v893 = vshll.u32 %v860, 16
      %v895 = vrot.slane %v893, 5
      %v896 = vsel %vm331, %v891, %v895
      %v897 = vshrl.u32 %v860, 16
      %v899 = vrot.slane %v897, 4
      %v900 = vor.u32 %v899, %v895
      %v901 = vrot.slane %v900, 4
      %v903 = vshll.u32 %v861, 16
      %v905 = vrot.slane %v903, 5
      %v906 = vsel %vm331, %v901, %v905
      %v908 = vshrl.u32 %v862, 16
      %v910 = vrot.slane %v908, 4
      %v911 = vshll.u32 %v862, 16
      %v913 = vrot.slane %v911, 5
      %v914 = vor.u32 %v910, %v913
      %v915 = vrot.slane %v914, 4
      %v917 = vshll.u32 %v863, 16
      %v919 = vrot.slane %v917, 5
      %v920 = vsel %vm331, %v915, %v919
      %v921 = vshrl.u32 %v863, 16
      %v923 = vrot.slane %v921, 4
      %v924 = vor.u32 %v923, %v919
      %v925 = vrot.slane %v924, 4
      %v927 = vshll.u32 %v864, 16
      %v929 = vrot.slane %v927, 5
      %v930 = vsel %vm331, %v925, %v929
      %v932 = vshrl.u32 %v865, 16
      %v934 = vrot.slane %v932, 4
      %v935 = vshll.u32 %v865, 16
      %v937 = vrot.slane %v935, 5
      %v938 = vor.u32 %v934, %v937
      %v939 = vrot.slane %v938, 4
      %v941 = vshll.u32 %v866, 16
      %v943 = vrot.slane %v941, 5
      %v944 = vsel %vm331, %v939, %v943
      %v945 = vshrl.u32 %v866, 16
      %v947 = vrot.slane %v945, 4
      %v948 = vor.u32 %v947, %v943
      %v949 = vrot.slane %v948, 4
      %v951 = vshll.u32 %v867, 16
      %v953 = vrot.slane %v951, 5
      %v954 = vsel %vm331, %v949, %v953
      %v956 = vshrl.u32 %v868, 16
      %v958 = vrot.slane %v956, 4
      %v959 = vshll.u32 %v868, 16
      %v961 = vrot.slane %v959, 5
      %v962 = vor.u32 %v958, %v961
      %v963 = vrot.slane %v962, 4
      %v965 = vshll.u32 %v869, 16
      %v967 = vrot.slane %v965, 5
      %v968 = vsel %vm331, %v963, %v967
      %v969 = vshrl.u32 %v869, 16
      %v971 = vrot.slane %v969, 4
      %v972 = vor.u32 %v971, %v967
      %v973 = vrot.slane %v972, 4
      %v975 = vshll.u32 %v870, 16
      %v977 = vrot.slane %v975, 5
      %v978 = vsel %vm331, %v973, %v977
      %v980 = vshrl.u32 %v871, 16
      %v982 = vrot.slane %v980, 4
      %v983 = vshll.u32 %v871, 16
      %v985 = vrot.slane %v983, 5
      %v986 = vor.u32 %v982, %v985
      %v987 = vrot.slane %v986, 4
      %v989 = vshll.u32 %v872, 16
      %v991 = vrot.slane %v989, 5
      %v992 = vsel %vm331, %v987, %v991
      %v993 = vshrl.u32 %v872, 16
      %v995 = vrot.slane %v993, 4
      %v996 = vor.u32 %v995, %v991
      %v997 = vrot.slane %v996, 4
      %v999 = vshll.u32 %v873, 16
      %v1001 = vrot.slane %v999, 5
      %v1002 = vsel %vm331, %v997, %v1001
      %v1004 = vshrl.u32 %v874, 16
      %v1006 = vrot.slane %v1004, 4
      %v1007 = vshll.u32 %v874, 16
      %v1009 = vrot.slane %v1007, 5
      %v1010 = vor.u32 %v1006, %v1009
      %v1011 = vrot.slane %v1010, 4
      %v1013 = vshll.u32 %v875, 16
      %v1015 = vrot.slane %v1013, 5
      %v1016 = vsel %vm331, %v1011, %v1015
      %v1017 = vshrl.u32 %v875, 16
      %v1019 = vrot.slane %v1017, 4
      %v1020 = vor.u32 %v1019, %v1015
      %v1021 = vrot.slane %v1020, 4
      %v1023 = vshll.u32 %v876, 16
      %v1025 = vrot.slane %v1023, 5
      %v1026 = vsel %vm331, %v1021, %v1025
      %v1028 = vshrl.u32 %v877, 16
      %v1030 = vrot.slane %v1028, 4
      %v1031 = vshll.u32 %v877, 16
      %v1033 = vrot.slane %v1031, 5
      %v1034 = vor.u32 %v1030, %v1033
      %v1035 = vrot.slane %v1034, 4
      %v1037 = vshll.u32 %v878, 16
      %v1039 = vrot.slane %v1037, 5
      %v1040 = vsel %vm331, %v1035, %v1039
      %v1041 = vshrl.u32 %v878, 16
      %v1043 = vrot.slane %v1041, 4
      %v1044 = vor.u32 %v1043, %v1039
      %v1045 = vrot.slane %v1044, 4
      %v1047 = vshll.u32 %v879, 16
      %v1049 = vrot.slane %v1047, 5
      %v1050 = vsel %vm331, %v1045, %v1049
      %v1052 = vshrl.u32 %v880, 16
      %v1054 = vrot.slane %v1052, 4
      %v1055 = vshll.u32 %v880, 16
      %v1057 = vrot.slane %v1055, 5
      %v1058 = vor.u32 %v1054, %v1057
      %v1059 = vrot.slane %v1058, 4
      %v1061 = vshll.u32 %v881, 16
      %v1063 = vrot.slane %v1061, 5
      %v1064 = vsel %vm331, %v1059, %v1063
      %v1065 = vshrl.u32 %v881, 16
      %v1067 = vrot.slane %v1065, 4
      %v1068 = vor.u32 %v1067, %v1063
      %v1069 = vrot.slane %v1068, 4
      %v1071 = vshll.u32 %v882, 16
      %v1073 = vrot.slane %v1071, 5
      %v1074 = vsel %vm331, %v1069, %v1073
      %1075 = vrot.lane.b32.xlu0 %v896, 16
      %v1076 = vpop.permute.xlu0 %1075
      %1077 = vrot.lane.b32.xlu0 %v906, 16
      %v1078 = vpop.permute.xlu0 %1077
      %1079 = vrot.lane.b32.xlu0 %v920, 16
      %v1080 = vpop.permute.xlu0 %1079
      %1081 = vrot.lane.b32.xlu0 %v930, 16
      %v1082 = vpop.permute.xlu0 %1081
      %1083 = vrot.lane.b32.xlu0 %v944, 16
      %v1084 = vpop.permute.xlu0 %1083
      %1085 = vrot.lane.b32.xlu0 %v954, 16
      %v1086 = vpop.permute.xlu0 %1085
      %1087 = vrot.lane.b32.xlu0 %v968, 16
      %v1088 = vpop.permute.xlu0 %1087
      %1089 = vrot.lane.b32.xlu0 %v978, 16
      %v1090 = vpop.permute.xlu0 %1089
      %1091 = vrot.lane.b32.xlu0 %v992, 16
      %v1092 = vpop.permute.xlu0 %1091
      %1093 = vrot.lane.b32.xlu0 %v1002, 16
      %v1094 = vpop.permute.xlu0 %1093
      %1095 = vrot.lane.b32.xlu0 %v1016, 16
      %v1096 = vpop.permute.xlu0 %1095
      %1097 = vrot.lane.b32.xlu0 %v1026, 16
      %v1098 = vpop.permute.xlu0 %1097
      %1099 = vrot.lane.b32.xlu0 %v1040, 16
      %v1100 = vpop.permute.xlu0 %1099
      %1101 = vrot.lane.b32.xlu0 %v1050, 16
      %v1102 = vpop.permute.xlu0 %1101
      %1103 = vrot.lane.b32.xlu0 %v1064, 16
      %v1104 = vpop.permute.xlu0 %1103
      %1105 = vrot.lane.b32.xlu0 %v1074, 16
      %v1106 = vpop.permute.xlu0 %1105
      %vm1123 = vcmask 158848
      %1124 = vst.msk [vmem:[#allocation2] sm:$0xf] %vm1123, %v1076
      %1125 = vst.msk [vmem:[#allocation2 + $0x4] sm:$0xf] %vm1123, %v1078
      %1126 = vst.msk [vmem:[#allocation2 + $0x8] sm:$0xf] %vm1123, %v1080
      %1127 = vst.msk [vmem:[#allocation2 + $0xc] sm:$0xf] %vm1123, %v1082
      %1128 = vst.msk [vmem:[#allocation2 + $0x10] sm:$0xf] %vm1123, %v1084
      %1129 = vst.msk [vmem:[#allocation2 + $0x14] sm:$0xf] %vm1123, %v1086
      %1130 = vst.msk [vmem:[#allocation2 + $0x18] sm:$0xf] %vm1123, %v1088
      %1131 = vst.msk [vmem:[#allocation2 + $0x1c] sm:$0xf] %vm1123, %v1090
      %1132 = vst.msk [vmem:[#allocation2 + $0x20] sm:$0xf] %vm1123, %v1092
      %1133 = vst.msk [vmem:[#allocation2 + $0x24] sm:$0xf] %vm1123, %v1094
      %1134 = vst.msk [vmem:[#allocation2 + $0x28] sm:$0xf] %vm1123, %v1096
      %1135 = vst.msk [vmem:[#allocation2 + $0x2c] sm:$0xf] %vm1123, %v1098
      %1136 = vst.msk [vmem:[#allocation2 + $0x30] sm:$0xf] %vm1123, %v1100
      %1137 = vst.msk [vmem:[#allocation2 + $0x34] sm:$0xf] %vm1123, %v1102
      %1138 = vst.msk [vmem:[#allocation2 + $0x38] sm:$0xf] %vm1123, %v1104
      %1139 = vst.msk [vmem:[#allocation2 + $0x3c] sm:$0xf] %vm1123, %v1106
      %v1140 = vld [vmem:[%s761] sm:$0xe]
      %v1141 = vld [vmem:[%s761 + $0x4] sm:$0xf]
      %v1142 = vld [vmem:[%s761 + $0x8] sm:$0x1]
      %v1143 = vld [vmem:[%s761 + $0xc] sm:$0xe]
      %v1144 = vld [vmem:[%s761 + $0x10] sm:$0xf]
      %v1145 = vld [vmem:[%s761 + $0x14] sm:$0x1]
      %v1146 = vld [vmem:[%s761 + $0x18] sm:$0xe]
      %v1147 = vld [vmem:[%s761 + $0x1c] sm:$0xf]
      %v1148 = vld [vmem:[%s761 + $0x20] sm:$0x1]
      %v1149 = vld [vmem:[%s761 + $0x24] sm:$0xe]
      %v1150 = vld [vmem:[%s761 + $0x28] sm:$0xf]
      %v1151 = vld [vmem:[%s761 + $0x2c] sm:$0x1]
      %v1152 = vld [vmem:[%s761 + $0x30] sm:$0xe]
      %v1153 = vld [vmem:[%s761 + $0x34] sm:$0xf]
      %v1154 = vld [vmem:[%s761 + $0x38] sm:$0x1]
      %v1155 = vld [vmem:[%s761 + $0x3c] sm:$0xe]
      %v1156 = vld [vmem:[%s761 + $0x40] sm:$0xf]
      %v1157 = vld [vmem:[%s761 + $0x44] sm:$0x1]
      %v1158 = vld [vmem:[%s761 + $0x48] sm:$0xe]
      %v1159 = vld [vmem:[%s761 + $0x4c] sm:$0xf]
      %v1160 = vld [vmem:[%s761 + $0x50] sm:$0x1]
      %v1161 = vld [vmem:[%s761 + $0x54] sm:$0xe]
      %v1162 = vld [vmem:[%s761 + $0x58] sm:$0xf]
      %v1163 = vld [vmem:[%s761 + $0x5c] sm:$0x1]
      %v1188 = vrot.slane %v1140, 5
      %v1189 = vrot.slane %v1188, 4
      %v1190 = vrot.slane %v1141, 5
      %v1191 = vsel %vm639, %v1189, %v1190
      %v1192 = vrot.slane %v1190, 4
      %v1193 = vrot.slane %v1142, 5
      %v1194 = vsel %vm639, %v1192, %v1193
      %v1195 = vrot.slane %v1143, 5
      %v1196 = vrot.slane %v1195, 4
      %v1197 = vrot.slane %v1144, 5
      %v1198 = vsel %vm639, %v1196, %v1197
      %v1199 = vrot.slane %v1197, 4
      %v1200 = vrot.slane %v1145, 5
      %v1201 = vsel %vm639, %v1199, %v1200
      %v1202 = vrot.slane %v1146, 5
      %v1203 = vrot.slane %v1202, 4
      %v1204 = vrot.slane %v1147, 5
      %v1205 = vsel %vm639, %v1203, %v1204
      %v1206 = vrot.slane %v1204, 4
      %v1207 = vrot.slane %v1148, 5
      %v1208 = vsel %vm639, %v1206, %v1207
      %v1209 = vrot.slane %v1149, 5
      %v1210 = vrot.slane %v1209, 4
      %v1211 = vrot.slane %v1150, 5
      %v1212 = vsel %vm639, %v1210, %v1211
      %v1213 = vrot.slane %v1211, 4
      %v1214 = vrot.slane %v1151, 5
      %v1215 = vsel %vm639, %v1213, %v1214
      %v1216 = vrot.slane %v1152, 5
      %v1217 = vrot.slane %v1216, 4
      %v1218 = vrot.slane %v1153, 5
      %v1219 = vsel %vm639, %v1217, %v1218
      %v1220 = vrot.slane %v1218, 4
      %v1221 = vrot.slane %v1154, 5
      %v1222 = vsel %vm639, %v1220, %v1221
      %v1223 = vrot.slane %v1155, 5
      %v1224 = vrot.slane %v1223, 4
      %v1225 = vrot.slane %v1156, 5
      %v1226 = vsel %vm639, %v1224, %v1225
      %v1227 = vrot.slane %v1225, 4
      %v1228 = vrot.slane %v1157, 5
      %v1229 = vsel %vm639, %v1227, %v1228
      %v1230 = vrot.slane %v1158, 5
      %v1231 = vrot.slane %v1230, 4
      %v1232 = vrot.slane %v1159, 5
      %v1233 = vsel %vm639, %v1231, %v1232
      %v1234 = vrot.slane %v1232, 4
      %v1235 = vrot.slane %v1160, 5
      %v1236 = vsel %vm639, %v1234, %v1235
      %v1237 = vrot.slane %v1161, 5
      %v1238 = vrot.slane %v1237, 4
      %v1239 = vrot.slane %v1162, 5
      %v1240 = vsel %vm639, %v1238, %v1239
      %v1241 = vrot.slane %v1239, 4
      %v1242 = vrot.slane %v1163, 5
      %v1243 = vsel %vm639, %v1241, %v1242
      %1244 = vrot.lane.b32.xlu0 %v1191, 20
      %v1245 = vpop.permute.xlu0 %1244
      %1246 = vrot.lane.b32.xlu0 %v1194, 20
      %v1247 = vpop.permute.xlu0 %1246
      %1248 = vrot.lane.b32.xlu0 %v1198, 20
      %v1249 = vpop.permute.xlu0 %1248
      %1250 = vrot.lane.b32.xlu0 %v1201, 20
      %v1251 = vpop.permute.xlu0 %1250
      %1252 = vrot.lane.b32.xlu0 %v1205, 20
      %v1253 = vpop.permute.xlu0 %1252
      %1254 = vrot.lane.b32.xlu0 %v1208, 20
      %v1255 = vpop.permute.xlu0 %1254
      %1256 = vrot.lane.b32.xlu0 %v1212, 20
      %v1257 = vpop.permute.xlu0 %1256
      %1258 = vrot.lane.b32.xlu0 %v1215, 20
      %v1259 = vpop.permute.xlu0 %1258
      %1260 = vrot.lane.b32.xlu0 %v1219, 20
      %v1261 = vpop.permute.xlu0 %1260
      %1262 = vrot.lane.b32.xlu0 %v1222, 20
      %v1263 = vpop.permute.xlu0 %1262
      %1264 = vrot.lane.b32.xlu0 %v1226, 20
      %v1265 = vpop.permute.xlu0 %1264
      %1266 = vrot.lane.b32.xlu0 %v1229, 20
      %v1267 = vpop.permute.xlu0 %1266
      %1268 = vrot.lane.b32.xlu0 %v1233, 20
      %v1269 = vpop.permute.xlu0 %1268
      %1270 = vrot.lane.b32.xlu0 %v1236, 20
      %v1271 = vpop.permute.xlu0 %1270
      %1272 = vrot.lane.b32.xlu0 %v1240, 20
      %v1273 = vpop.permute.xlu0 %1272
      %1274 = vrot.lane.b32.xlu0 %v1243, 20
      %v1275 = vpop.permute.xlu0 %1274
      %vm1292 = vcmask 191648
      %1293 = vst.msk [vmem:[#allocation2] sm:$0xf] %vm1292, %v1245
      %1294 = vst.msk [vmem:[#allocation2 + $0x4] sm:$0xf] %vm1292, %v1247
      %1295 = vst.msk [vmem:[#allocation2 + $0x8] sm:$0xf] %vm1292, %v1249
      %1296 = vst.msk [vmem:[#allocation2 + $0xc] sm:$0xf] %vm1292, %v1251
      %1297 = vst.msk [vmem:[#allocation2 + $0x10] sm:$0xf] %vm1292, %v1253
      %1298 = vst.msk [vmem:[#allocation2 + $0x14] sm:$0xf] %vm1292, %v1255
      %1299 = vst.msk [vmem:[#allocation2 + $0x18] sm:$0xf] %vm1292, %v1257
      %1300 = vst.msk [vmem:[#allocation2 + $0x1c] sm:$0xf] %vm1292, %v1259
      %1301 = vst.msk [vmem:[#allocation2 + $0x20] sm:$0xf] %vm1292, %v1261
      %1302 = vst.msk [vmem:[#allocation2 + $0x24] sm:$0xf] %vm1292, %v1263
      %1303 = vst.msk [vmem:[#allocation2 + $0x28] sm:$0xf] %vm1292, %v1265
      %1304 = vst.msk [vmem:[#allocation2 + $0x2c] sm:$0xf] %vm1292, %v1267
      %1305 = vst.msk [vmem:[#allocation2 + $0x30] sm:$0xf] %vm1292, %v1269
      %1306 = vst.msk [vmem:[#allocation2 + $0x34] sm:$0xf] %vm1292, %v1271
      %1307 = vst.msk [vmem:[#allocation2 + $0x38] sm:$0xf] %vm1292, %v1273
      %1308 = vst.msk [vmem:[#allocation2 + $0x3c] sm:$0xf] %vm1292, %v1275
      %s1309 = scalar_lea.vmem %s247, 24
      %v1310 = vld [vmem:[%s1309] sm:$0xf]
      %v1311 = vld [vmem:[%s1309 + $0x4] sm:$0xf]
      %v1312 = vld [vmem:[%s1309 + $0xc] sm:$0xf]
      %v1313 = vld [vmem:[%s1309 + $0x10] sm:$0xf]
      %v1314 = vld [vmem:[%s1309 + $0x18] sm:$0xf]
      %v1315 = vld [vmem:[%s1309 + $0x1c] sm:$0xf]
      %v1316 = vld [vmem:[%s1309 + $0x24] sm:$0xf]
      %v1317 = vld [vmem:[%s1309 + $0x28] sm:$0xf]
      %v1318 = vld [vmem:[%s1309 + $0x30] sm:$0xf]
      %v1319 = vld [vmem:[%s1309 + $0x34] sm:$0xf]
      %v1320 = vld [vmem:[%s1309 + $0x3c] sm:$0xf]
      %v1321 = vld [vmem:[%s1309 + $0x40] sm:$0xf]
      %v1322 = vld [vmem:[%s1309 + $0x48] sm:$0xf]
      %v1323 = vld [vmem:[%s1309 + $0x4c] sm:$0xf]
      %v1324 = vld [vmem:[%s1309 + $0x54] sm:$0xf]
      %v1325 = vld [vmem:[%s1309 + $0x58] sm:$0xf]
      %1342 = vrot.lane.b32.xlu0 %v1310, 24
      %v1343 = vpop.permute.xlu0 %1342
      %1344 = vrot.lane.b32.xlu0 %v1311, 24
      %v1345 = vpop.permute.xlu0 %1344
      %1346 = vrot.lane.b32.xlu0 %v1312, 24
      %v1347 = vpop.permute.xlu0 %1346
      %1348 = vrot.lane.b32.xlu0 %v1313, 24
      %v1349 = vpop.permute.xlu0 %1348
      %1350 = vrot.lane.b32.xlu0 %v1314, 24
      %v1351 = vpop.permute.xlu0 %1350
      %1352 = vrot.lane.b32.xlu0 %v1315, 24
      %v1353 = vpop.permute.xlu0 %1352
      %1354 = vrot.lane.b32.xlu0 %v1316, 24
      %v1355 = vpop.permute.xlu0 %1354
      %1356 = vrot.lane.b32.xlu0 %v1317, 24
      %v1357 = vpop.permute.xlu0 %1356
      %1358 = vrot.lane.b32.xlu0 %v1318, 24
      %v1359 = vpop.permute.xlu0 %1358
      %1360 = vrot.lane.b32.xlu0 %v1319, 24
      %v1361 = vpop.permute.xlu0 %1360
      %1362 = vrot.lane.b32.xlu0 %v1320, 24
      %v1363 = vpop.permute.xlu0 %1362
      %1364 = vrot.lane.b32.xlu0 %v1321, 24
      %v1365 = vpop.permute.xlu0 %1364
      %1366 = vrot.lane.b32.xlu0 %v1322, 24
      %v1367 = vpop.permute.xlu0 %1366
      %1368 = vrot.lane.b32.xlu0 %v1323, 24
      %v1369 = vpop.permute.xlu0 %1368
      %1370 = vrot.lane.b32.xlu0 %v1324, 24
      %v1371 = vpop.permute.xlu0 %1370
      %1372 = vrot.lane.b32.xlu0 %v1325, 24
      %v1373 = vpop.permute.xlu0 %1372
      %vm1390 = vcmask 224448
      %1391 = vst.msk [vmem:[#allocation2] sm:$0xf] %vm1390, %v1343
      %1392 = vst.msk [vmem:[#allocation2 + $0x4] sm:$0xf] %vm1390, %v1345
      %1393 = vst.msk [vmem:[#allocation2 + $0x8] sm:$0xf] %vm1390, %v1347
      %1394 = vst.msk [vmem:[#allocation2 + $0xc] sm:$0xf] %vm1390, %v1349
      %1395 = vst.msk [vmem:[#allocation2 + $0x10] sm:$0xf] %vm1390, %v1351
      %1396 = vst.msk [vmem:[#allocation2 + $0x14] sm:$0xf] %vm1390, %v1353
      %1397 = vst.msk [vmem:[#allocation2 + $0x18] sm:$0xf] %vm1390, %v1355
      %1398 = vst.msk [vmem:[#allocation2 + $0x1c] sm:$0xf] %vm1390, %v1357
      %1399 = vst.msk [vmem:[#allocation2 + $0x20] sm:$0xf] %vm1390, %v1359
      %1400 = vst.msk [vmem:[#allocation2 + $0x24] sm:$0xf] %vm1390, %v1361
      %1401 = vst.msk [vmem:[#allocation2 + $0x28] sm:$0xf] %vm1390, %v1363
      %1402 = vst.msk [vmem:[#allocation2 + $0x2c] sm:$0xf] %vm1390, %v1365
      %1403 = vst.msk [vmem:[#allocation2 + $0x30] sm:$0xf] %vm1390, %v1367
      %1404 = vst.msk [vmem:[#allocation2 + $0x34] sm:$0xf] %vm1390, %v1369
      %1405 = vst.msk [vmem:[#allocation2 + $0x38] sm:$0xf] %vm1390, %v1371
      %1406 = vst.msk [vmem:[#allocation2 + $0x3c] sm:$0xf] %vm1390, %v1373
      %v1407 = vld [vmem:[%s1309] sm:$0xf]
      %v1408 = vld [vmem:[%s1309 + $0x4] sm:$0xf]
      %v1409 = vld [vmem:[%s1309 + $0x8] sm:$0x1]
      %v1410 = vld [vmem:[%s1309 + $0xc] sm:$0xf]
      %v1411 = vld [vmem:[%s1309 + $0x10] sm:$0xf]
      %v1412 = vld [vmem:[%s1309 + $0x14] sm:$0x1]
      %v1413 = vld [vmem:[%s1309 + $0x18] sm:$0xf]
      %v1414 = vld [vmem:[%s1309 + $0x1c] sm:$0xf]
      %v1415 = vld [vmem:[%s1309 + $0x20] sm:$0x1]
      %v1416 = vld [vmem:[%s1309 + $0x24] sm:$0xf]
      %v1417 = vld [vmem:[%s1309 + $0x28] sm:$0xf]
      %v1418 = vld [vmem:[%s1309 + $0x2c] sm:$0x1]
      %v1419 = vld [vmem:[%s1309 + $0x30] sm:$0xf]
      %v1420 = vld [vmem:[%s1309 + $0x34] sm:$0xf]
      %v1421 = vld [vmem:[%s1309 + $0x38] sm:$0x1]
      %v1422 = vld [vmem:[%s1309 + $0x3c] sm:$0xf]
      %v1423 = vld [vmem:[%s1309 + $0x40] sm:$0xf]
      %v1424 = vld [vmem:[%s1309 + $0x44] sm:$0x1]
      %v1425 = vld [vmem:[%s1309 + $0x48] sm:$0xf]
      %v1426 = vld [vmem:[%s1309 + $0x4c] sm:$0xf]
      %v1427 = vld [vmem:[%s1309 + $0x50] sm:$0x1]
      %v1428 = vld [vmem:[%s1309 + $0x54] sm:$0xf]
      %v1429 = vld [vmem:[%s1309 + $0x58] sm:$0xf]
      %v1430 = vld [vmem:[%s1309 + $0x5c] sm:$0x1]
      %v1432 = vshrl.u32 %v1407, 16
      %v1434 = vrot.slane %v1432, 4
      %v1435 = vshll.u32 %v1407, 16
      %v1437 = vrot.slane %v1435, 5
      %v1438 = vor.u32 %v1434, %v1437
      %v1439 = vrot.slane %v1438, 4
      %v1441 = vshll.u32 %v1408, 16
      %v1443 = vrot.slane %v1441, 5
      %v1444 = vsel %vm331, %v1439, %v1443
      %v1445 = vshrl.u32 %v1408, 16
      %v1447 = vrot.slane %v1445, 4
      %v1448 = vor.u32 %v1447, %v1443
      %v1449 = vrot.slane %v1448, 4
      %v1451 = vshll.u32 %v1409, 16
      %v1453 = vrot.slane %v1451, 5
      %v1454 = vsel %vm331, %v1449, %v1453
      %v1456 = vshrl.u32 %v1410, 16
      %v1458 = vrot.slane %v1456, 4
      %v1459 = vshll.u32 %v1410, 16
      %v1461 = vrot.slane %v1459, 5
      %v1462 = vor.u32 %v1458, %v1461
      %v1463 = vrot.slane %v1462, 4
      %v1465 = vshll.u32 %v1411, 16
      %v1467 = vrot.slane %v1465, 5
      %v1468 = vsel %vm331, %v1463, %v1467
      %v1469 = vshrl.u32 %v1411, 16
      %v1471 = vrot.slane %v1469, 4
      %v1472 = vor.u32 %v1471, %v1467
      %v1473 = vrot.slane %v1472, 4
      %v1475 = vshll.u32 %v1412, 16
      %v1477 = vrot.slane %v1475, 5
      %v1478 = vsel %vm331, %v1473, %v1477
      %v1480 = vshrl.u32 %v1413, 16
      %v1482 = vrot.slane %v1480, 4
      %v1483 = vshll.u32 %v1413, 16
      %v1485 = vrot.slane %v1483, 5
      %v1486 = vor.u32 %v1482, %v1485
      %v1487 = vrot.slane %v1486, 4
      %v1489 = vshll.u32 %v1414, 16
      %v1491 = vrot.slane %v1489, 5
      %v1492 = vsel %vm331, %v1487, %v1491
      %v1493 = vshrl.u32 %v1414, 16
      %v1495 = vrot.slane %v1493, 4
      %v1496 = vor.u32 %v1495, %v1491
      %v1497 = vrot.slane %v1496, 4
      %v1499 = vshll.u32 %v1415, 16
      %v1501 = vrot.slane %v1499, 5
      %v1502 = vsel %vm331, %v1497, %v1501
      %v1504 = vshrl.u32 %v1416, 16
      %v1506 = vrot.slane %v1504, 4
      %v1507 = vshll.u32 %v1416, 16
      %v1509 = vrot.slane %v1507, 5
      %v1510 = vor.u32 %v1506, %v1509
      %v1511 = vrot.slane %v1510, 4
      %v1513 = vshll.u32 %v1417, 16
      %v1515 = vrot.slane %v1513, 5
      %v1516 = vsel %vm331, %v1511, %v1515
      %v1517 = vshrl.u32 %v1417, 16
      %v1519 = vrot.slane %v1517, 4
      %v1520 = vor.u32 %v1519, %v1515
      %v1521 = vrot.slane %v1520, 4
      %v1523 = vshll.u32 %v1418, 16
      %v1525 = vrot.slane %v1523, 5
      %v1526 = vsel %vm331, %v1521, %v1525
      %v1528 = vshrl.u32 %v1419, 16
      %v1530 = vrot.slane %v1528, 4
      %v1531 = vshll.u32 %v1419, 16
      %v1533 = vrot.slane %v1531, 5
      %v1534 = vor.u32 %v1530, %v1533
      %v1535 = vrot.slane %v1534, 4
      %v1537 = vshll.u32 %v1420, 16
      %v1539 = vrot.slane %v1537, 5
      %v1540 = vsel %vm331, %v1535, %v1539
      %v1541 = vshrl.u32 %v1420, 16
      %v1543 = vrot.slane %v1541, 4
      %v1544 = vor.u32 %v1543, %v1539
      %v1545 = vrot.slane %v1544, 4
      %v1547 = vshll.u32 %v1421, 16
      %v1549 = vrot.slane %v1547, 5
      %v1550 = vsel %vm331, %v1545, %v1549
      %v1552 = vshrl.u32 %v1422, 16
      %v1554 = vrot.slane %v1552, 4
      %v1555 = vshll.u32 %v1422, 16
      %v1557 = vrot.slane %v1555, 5
      %v1558 = vor.u32 %v1554, %v1557
      %v1559 = vrot.slane %v1558, 4
      %v1561 = vshll.u32 %v1423, 16
      %v1563 = vrot.slane %v1561, 5
      %v1564 = vsel %vm331, %v1559, %v1563
      %v1565 = vshrl.u32 %v1423, 16
      %v1567 = vrot.slane %v1565, 4
      %v1568 = vor.u32 %v1567, %v1563
      %v1569 = vrot.slane %v1568, 4
      %v1571 = vshll.u32 %v1424, 16
      %v1573 = vrot.slane %v1571, 5
      %v1574 = vsel %vm331, %v1569, %v1573
      %v1576 = vshrl.u32 %v1425, 16
      %v1578 = vrot.slane %v1576, 4
      %v1579 = vshll.u32 %v1425, 16
      %v1581 = vrot.slane %v1579, 5
      %v1582 = vor.u32 %v1578, %v1581
      %v1583 = vrot.slane %v1582, 4
      %v1585 = vshll.u32 %v1426, 16
      %v1587 = vrot.slane %v1585, 5
      %v1588 = vsel %vm331, %v1583, %v1587
      %v1589 = vshrl.u32 %v1426, 16
      %v1591 = vrot.slane %v1589, 4
      %v1592 = vor.u32 %v1591, %v1587
      %v1593 = vrot.slane %v1592, 4
      %v1595 = vshll.u32 %v1427, 16
      %v1597 = vrot.slane %v1595, 5
      %v1598 = vsel %vm331, %v1593, %v1597
      %v1600 = vshrl.u32 %v1428, 16
      %v1602 = vrot.slane %v1600, 4
      %v1603 = vshll.u32 %v1428, 16
      %v1605 = vrot.slane %v1603, 5
      %v1606 = vor.u32 %v1602, %v1605
      %v1607 = vrot.slane %v1606, 4
      %v1609 = vshll.u32 %v1429, 16
      %v1611 = vrot.slane %v1609, 5
      %v1612 = vsel %vm331, %v1607, %v1611
      %v1613 = vshrl.u32 %v1429, 16
      %v1615 = vrot.slane %v1613, 4
      %v1616 = vor.u32 %v1615, %v1611
      %v1617 = vrot.slane %v1616, 4
      %v1619 = vshll.u32 %v1430, 16
      %v1621 = vrot.slane %v1619, 5
      %v1622 = vsel %vm331, %v1617, %v1621
      %1623 = vrot.lane.b32.xlu0 %v1444, 28
      %v1624 = vpop.permute.xlu0 %1623
      %1625 = vrot.lane.b32.xlu0 %v1454, 28
      %v1626 = vpop.permute.xlu0 %1625
      %1627 = vrot.lane.b32.xlu0 %v1468, 28
      %v1628 = vpop.permute.xlu0 %1627
      %1629 = vrot.lane.b32.xlu0 %v1478, 28
      %v1630 = vpop.permute.xlu0 %1629
      %1631 = vrot.lane.b32.xlu0 %v1492, 28
      %v1632 = vpop.permute.xlu0 %1631
      %1633 = vrot.lane.b32.xlu0 %v1502, 28
      %v1634 = vpop.permute.xlu0 %1633
      %1635 = vrot.lane.b32.xlu0 %v1516, 28
      %v1636 = vpop.permute.xlu0 %1635
      %1637 = vrot.lane.b32.xlu0 %v1526, 28
      %v1638 = vpop.permute.xlu0 %1637
      %1639 = vrot.lane.b32.xlu0 %v1540, 28
      %v1640 = vpop.permute.xlu0 %1639
      %1641 = vrot.lane.b32.xlu0 %v1550, 28
      %v1642 = vpop.permute.xlu0 %1641
      %1643 = vrot.lane.b32.xlu0 %v1564, 28
      %v1644 = vpop.permute.xlu0 %1643
      %1645 = vrot.lane.b32.xlu0 %v1574, 28
      %v1646 = vpop.permute.xlu0 %1645
      %1647 = vrot.lane.b32.xlu0 %v1588, 28
      %v1648 = vpop.permute.xlu0 %1647
      %1649 = vrot.lane.b32.xlu0 %v1598, 28
      %v1650 = vpop.permute.xlu0 %1649
      %1651 = vrot.lane.b32.xlu0 %v1612, 28
      %v1652 = vpop.permute.xlu0 %1651
      %1653 = vrot.lane.b32.xlu0 %v1622, 28
      %v1654 = vpop.permute.xlu0 %1653
      %vm1671 = vcmask 257248
      %1672 = vst.msk [vmem:[#allocation2] sm:$0xf] %vm1671, %v1624
      %1673 = vst.msk [vmem:[#allocation2 + $0x4] sm:$0xf] %vm1671, %v1626
      %1674 = vst.msk [vmem:[#allocation2 + $0x8] sm:$0xf] %vm1671, %v1628
      %1675 = vst.msk [vmem:[#allocation2 + $0xc] sm:$0xf] %vm1671, %v1630
      %1676 = vst.msk [vmem:[#allocation2 + $0x10] sm:$0xf] %vm1671, %v1632
      %1677 = vst.msk [vmem:[#allocation2 + $0x14] sm:$0xf] %vm1671, %v1634
      %1678 = vst.msk [vmem:[#allocation2 + $0x18] sm:$0xf] %vm1671, %v1636
      %1679 = vst.msk [vmem:[#allocation2 + $0x1c] sm:$0xf] %vm1671, %v1638
      %1680 = vst.msk [vmem:[#allocation2 + $0x20] sm:$0xf] %vm1671, %v1640
      %1681 = vst.msk [vmem:[#allocation2 + $0x24] sm:$0xf] %vm1671, %v1642
      %1682 = vst.msk [vmem:[#allocation2 + $0x28] sm:$0xf] %vm1671, %v1644
      %1683 = vst.msk [vmem:[#allocation2 + $0x2c] sm:$0xf] %vm1671, %v1646
      %1684 = vst.msk [vmem:[#allocation2 + $0x30] sm:$0xf] %vm1671, %v1648
      %1685 = vst.msk [vmem:[#allocation2 + $0x34] sm:$0xf] %vm1671, %v1650
      %1686 = vst.msk [vmem:[#allocation2 + $0x38] sm:$0xf] %vm1671, %v1652
      %1687 = vst.msk [vmem:[#allocation2 + $0x3c] sm:$0xf] %vm1671, %v1654
      %v1688 = vld [vmem:[%s1309] sm:$0xe]
      %v1689 = vld [vmem:[%s1309 + $0x4] sm:$0xf]
      %v1690 = vld [vmem:[%s1309 + $0x8] sm:$0x1]
      %v1691 = vld [vmem:[%s1309 + $0xc] sm:$0xe]
      %v1692 = vld [vmem:[%s1309 + $0x10] sm:$0xf]
      %v1693 = vld [vmem:[%s1309 + $0x14] sm:$0x1]
      %v1694 = vld [vmem:[%s1309 + $0x18] sm:$0xe]
      %v1695 = vld [vmem:[%s1309 + $0x1c] sm:$0xf]
      %v1696 = vld [vmem:[%s1309 + $0x20] sm:$0x1]
      %v1697 = vld [vmem:[%s1309 + $0x24] sm:$0xe]
      %v1698 = vld [vmem:[%s1309 + $0x28] sm:$0xf]
      %v1699 = vld [vmem:[%s1309 + $0x2c] sm:$0x1]
      %v1700 = vld [vmem:[%s1309 + $0x30] sm:$0xe]
      %v1701 = vld [vmem:[%s1309 + $0x34] sm:$0xf]
      %v1702 = vld [vmem:[%s1309 + $0x38] sm:$0x1]
      %v1703 = vld [vmem:[%s1309 + $0x3c] sm:$0xe]
      %v1704 = vld [vmem:[%s1309 + $0x40] sm:$0xf]
      %v1705 = vld [vmem:[%s1309 + $0x44] sm:$0x1]
      %v1706 = vld [vmem:[%s1309 + $0x48] sm:$0xe]
      %v1707 = vld [vmem:[%s1309 + $0x4c] sm:$0xf]
      %v1708 = vld [vmem:[%s1309 + $0x50] sm:$0x1]
      %v1709 = vld [vmem:[%s1309 + $0x54] sm:$0xe]
      %v1710 = vld [vmem:[%s1309 + $0x58] sm:$0xf]
      %v1711 = vld [vmem:[%s1309 + $0x5c] sm:$0x1]
      %v1736 = vrot.slane %v1688, 5
      %v1737 = vrot.slane %v1736, 4
      %v1738 = vrot.slane %v1689, 5
      %v1739 = vsel %vm639, %v1737, %v1738
      %v1740 = vrot.slane %v1738, 4
      %v1741 = vrot.slane %v1690, 5
      %v1742 = vsel %vm639, %v1740, %v1741
      %v1743 = vrot.slane %v1691, 5
      %v1744 = vrot.slane %v1743, 4
      %v1745 = vrot.slane %v1692, 5
      %v1746 = vsel %vm639, %v1744, %v1745
      %v1747 = vrot.slane %v1745, 4
      %v1748 = vrot.slane %v1693, 5
      %v1749 = vsel %vm639, %v1747, %v1748
      %v1750 = vrot.slane %v1694, 5
      %v1751 = vrot.slane %v1750, 4
      %v1752 = vrot.slane %v1695, 5
      %v1753 = vsel %vm639, %v1751, %v1752
      %v1754 = vrot.slane %v1752, 4
      %v1755 = vrot.slane %v1696, 5
      %v1756 = vsel %vm639, %v1754, %v1755
      %v1757 = vrot.slane %v1697, 5
      %v1758 = vrot.slane %v1757, 4
      %v1759 = vrot.slane %v1698, 5
      %v1760 = vsel %vm639, %v1758, %v1759
      %v1761 = vrot.slane %v1759, 4
      %v1762 = vrot.slane %v1699, 5
      %v1763 = vsel %vm639, %v1761, %v1762
      %v1764 = vrot.slane %v1700, 5
      %v1765 = vrot.slane %v1764, 4
      %v1766 = vrot.slane %v1701, 5
      %v1767 = vsel %vm639, %v1765, %v1766
      %v1768 = vrot.slane %v1766, 4
      %v1769 = vrot.slane %v1702, 5
      %v1770 = vsel %vm639, %v1768, %v1769
      %v1771 = vrot.slane %v1703, 5
      %v1772 = vrot.slane %v1771, 4
      %v1773 = vrot.slane %v1704, 5
      %v1774 = vsel %vm639, %v1772, %v1773
      %v1775 = vrot.slane %v1773, 4
      %v1776 = vrot.slane %v1705, 5
      %v1777 = vsel %vm639, %v1775, %v1776
      %v1778 = vrot.slane %v1706, 5
      %v1779 = vrot.slane %v1778, 4
      %v1780 = vrot.slane %v1707, 5
      %v1781 = vsel %vm639, %v1779, %v1780
      %v1782 = vrot.slane %v1780, 4
      %v1783 = vrot.slane %v1708, 5
      %v1784 = vsel %vm639, %v1782, %v1783
      %v1785 = vrot.slane %v1709, 5
      %v1786 = vrot.slane %v1785, 4
      %v1787 = vrot.slane %v1710, 5
      %v1788 = vsel %vm639, %v1786, %v1787
      %v1789 = vrot.slane %v1787, 4
      %v1790 = vrot.slane %v1711, 5
      %v1791 = vsel %vm639, %v1789, %v1790
      %1792 = vrot.lane.b32.xlu0 %v1739, 32
      %v1793 = vpop.permute.xlu0 %1792
      %1794 = vrot.lane.b32.xlu0 %v1742, 32
      %v1795 = vpop.permute.xlu0 %1794
      %1796 = vrot.lane.b32.xlu0 %v1746, 32
      %v1797 = vpop.permute.xlu0 %1796
      %1798 = vrot.lane.b32.xlu0 %v1749, 32
      %v1799 = vpop.permute.xlu0 %1798
      %1800 = vrot.lane.b32.xlu0 %v1753, 32
      %v1801 = vpop.permute.xlu0 %1800
      %1802 = vrot.lane.b32.xlu0 %v1756, 32
      %v1803 = vpop.permute.xlu0 %1802
      %1804 = vrot.lane.b32.xlu0 %v1760, 32
      %v1805 = vpop.permute.xlu0 %1804
      %1806 = vrot.lane.b32.xlu0 %v1763, 32
      %v1807 = vpop.permute.xlu0 %1806
      %1808 = vrot.lane.b32.xlu0 %v1767, 32
      %v1809 = vpop.permute.xlu0 %1808
      %1810 = vrot.lane.b32.xlu0 %v1770, 32
      %v1811 = vpop.permute.xlu0 %1810
      %1812 = vrot.lane.b32.xlu0 %v1774, 32
      %v1813 = vpop.permute.xlu0 %1812
      %1814 = vrot.lane.b32.xlu0 %v1777, 32
      %v1815 = vpop.permute.xlu0 %1814
      %1816 = vrot.lane.b32.xlu0 %v1781, 32
      %v1817 = vpop.permute.xlu0 %1816
      %1818 = vrot.lane.b32.xlu0 %v1784, 32
      %v1819 = vpop.permute.xlu0 %1818
      %1820 = vrot.lane.b32.xlu0 %v1788, 32
      %v1821 = vpop.permute.xlu0 %1820
      %1822 = vrot.lane.b32.xlu0 %v1791, 32
      %v1823 = vpop.permute.xlu0 %1822
      %vm1840 = vcmask 290048
      %1841 = vst.msk [vmem:[#allocation2] sm:$0xf] %vm1840, %v1793
      %1842 = vst.msk [vmem:[#allocation2 + $0x4] sm:$0xf] %vm1840, %v1795
      %1843 = vst.msk [vmem:[#allocation2 + $0x8] sm:$0xf] %vm1840, %v1797
      %1844 = vst.msk [vmem:[#allocation2 + $0xc] sm:$0xf] %vm1840, %v1799
      %1845 = vst.msk [vmem:[#allocation2 + $0x10] sm:$0xf] %vm1840, %v1801
      %1846 = vst.msk [vmem:[#allocation2 + $0x14] sm:$0xf] %vm1840, %v1803
      %1847 = vst.msk [vmem:[#allocation2 + $0x18] sm:$0xf] %vm1840, %v1805
      %1848 = vst.msk [vmem:[#allocation2 + $0x1c] sm:$0xf] %vm1840, %v1807
      %1849 = vst.msk [vmem:[#allocation2 + $0x20] sm:$0xf] %vm1840, %v1809
      %1850 = vst.msk [vmem:[#allocation2 + $0x24] sm:$0xf] %vm1840, %v1811
      %1851 = vst.msk [vmem:[#allocation2 + $0x28] sm:$0xf] %vm1840, %v1813
      %1852 = vst.msk [vmem:[#allocation2 + $0x2c] sm:$0xf] %vm1840, %v1815
      %1853 = vst.msk [vmem:[#allocation2 + $0x30] sm:$0xf] %vm1840, %v1817
      %1854 = vst.msk [vmem:[#allocation2 + $0x34] sm:$0xf] %vm1840, %v1819
      %1855 = vst.msk [vmem:[#allocation2 + $0x38] sm:$0xf] %vm1840, %v1821
      %1856 = vst.msk [vmem:[#allocation2 + $0x3c] sm:$0xf] %vm1840, %v1823
      %v1857 = vld [vmem:[#allocation2] sm:$0xf]
      %v1858 = vld [vmem:[#allocation2 + $0x4] sm:$0xf]
      %v1859 = vld [vmem:[#allocation2 + $0x8] sm:$0xf]
      %v1860 = vld [vmem:[#allocation2 + $0xc] sm:$0xf]
      %v1861 = vld [vmem:[#allocation2 + $0x10] sm:$0xf]
      %v1862 = vld [vmem:[#allocation2 + $0x14] sm:$0xf]
      %v1863 = vld [vmem:[#allocation2 + $0x18] sm:$0xf]
      %v1864 = vld [vmem:[#allocation2 + $0x1c] sm:$0xf]
      %v1865 = vld [vmem:[#allocation2 + $0x20] sm:$0xf]
      %v1866 = vld [vmem:[#allocation2 + $0x24] sm:$0xf]
      %v1867 = vld [vmem:[#allocation2 + $0x28] sm:$0xf]
      %v1868 = vld [vmem:[#allocation2 + $0x2c] sm:$0xf]
      %v1869 = vld [vmem:[#allocation2 + $0x30] sm:$0xf]
      %v1870 = vld [vmem:[#allocation2 + $0x34] sm:$0xf]
      %v1871 = vld [vmem:[#allocation2 + $0x38] sm:$0xf]
      %v1872 = vld [vmem:[#allocation2 + $0x3c] sm:$0xf]
      %v1873 = vld [vmem:[%s1] sm:$0xf]
      %v1874 = vld [vmem:[%s1 + $0x4] sm:$0xf]
      %v1875 = vld [vmem:[%s1 + $0x8] sm:$0xf]
      %v1876 = vld [vmem:[%s1 + $0xc] sm:$0xf]
      %v1877 = vld [vmem:[%s1 + $0x10] sm:$0x3]
      %v1894 = vunpack.c.l.b16 %v1857
      %v1895 = vunpack.c.l.b16 %v1858
      %v1896 = vunpack.c.l.b16 %v1859
      %v1897 = vunpack.c.l.b16 %v1860
      %v1898 = vunpack.c.l.b16 %v1861
      %v1899 = vunpack.c.l.b16 %v1862
      %v1900 = vunpack.c.l.b16 %v1863
      %v1901 = vunpack.c.l.b16 %v1864
      %v1902 = vunpack.c.l.b16 %v1865
      %v1903 = vunpack.c.l.b16 %v1866
      %v1904 = vunpack.c.l.b16 %v1867
      %v1905 = vunpack.c.l.b16 %v1868
      %v1906 = vunpack.c.l.b16 %v1869
      %v1907 = vunpack.c.l.b16 %v1870
      %v1908 = vunpack.c.l.b16 %v1871
      %v1909 = vunpack.c.l.b16 %v1872
      %v1910 = vpack.c.b16 %v1895, %v1894
      %v1911 = vpack.c.b16 %v1897, %v1896
      %v1912 = vpack.c.b16 %v1899, %v1898
      %v1913 = vpack.c.b16 %v1901, %v1900
      %v1914 = vpack.c.b16 %v1903, %v1902
      %v1915 = vpack.c.b16 %v1905, %v1904
      %v1916 = vpack.c.b16 %v1907, %v1906
      %v1917 = vpack.c.b16 %v1909, %v1908
      %v1923 = vunpack.c.l.b16 %v1873
      %v1924 = vunpack.c.l.b16 %v1874
      %v1925 = vunpack.c.l.b16 %v1875
      %v1926 = vunpack.c.l.b16 %v1876
      %v1927 = vunpack.c.l.b16 %v1877
      %v1928 = vpack.c.b16 %v1924, %v1923
      %v1929 = vpack.c.b16 %v1926, %v1925
      %v1930 = vpack.c.b16 %v1927, %v1927
      %vm1933 = vcmask 293888
      %v1935 = vsel %vm1933, %v1910, 0
      %v1938 = vsel %vm1933, %v1911, 0
      %v1941 = vsel %vm1933, %v1912, 0
      %v1944 = vsel %vm1933, %v1913, 0
      %v1947 = vsel %vm1933, %v1914, 0
      %v1950 = vsel %vm1933, %v1915, 0
      %v1953 = vsel %vm1933, %v1916, 0
      %v1956 = vsel %vm1933, %v1917, 0
      %vm1958 = vcmask 1041408
      %v1960 = vsel %vm1958, %v1930, 0
      %1962 = vmatpush.bf16.msra.mxu0 0
      %1963 = vmatpush.bf16.msra.mxu0 0
      %1964 = vmatpush.bf16.msra.mxu0 0
      %1965 = vmatpush.bf16.msra.mxu0 0
      %1966 = vmatpush.bf16.msra.mxu0 0
      %1967 = vmatpush.bf16.msra.mxu0 %v1960
      %1968 = vmatpush.bf16.msra.mxu0 %v1929
      %1969 = vmatpush.bf16.msra.mxu0 %v1928
      %1970 = vmatmul.bf16.gmra.mxu0 %v1935
      %v1971 = vpop.f32.mrf.mxu0
      %v1972 = vadd.f32 0.0, %v1971
      %v1973 = vpop.f32.mrf.mxu0
      %v1974 = vadd.f32 0.0, %v1973
      %1975 = vmatmul.bf16.gmra.mxu0 %v1938
      %v1976 = vpop.f32.mrf.mxu0
      %v1977 = vadd.f32 0.0, %v1976
      %v1978 = vpop.f32.mrf.mxu0
      %v1979 = vadd.f32 0.0, %v1978
      %1980 = vmatmul.bf16.gmra.mxu0 %v1941
      %v1981 = vpop.f32.mrf.mxu0
      %v1982 = vadd.f32 0.0, %v1981
      %v1983 = vpop.f32.mrf.mxu0
      %v1984 = vadd.f32 0.0, %v1983
      %1985 = vmatmul.bf16.gmra.mxu0 %v1944
      %v1986 = vpop.f32.mrf.mxu0
      %v1987 = vadd.f32 0.0, %v1986
      %v1988 = vpop.f32.mrf.mxu0
      %v1989 = vadd.f32 0.0, %v1988
      %1990 = vmatmul.bf16.gmra.mxu0 %v1947
      %v1991 = vpop.f32.mrf.mxu0
      %v1992 = vadd.f32 0.0, %v1991
      %v1993 = vpop.f32.mrf.mxu0
      %v1994 = vadd.f32 0.0, %v1993
      %1995 = vmatmul.bf16.gmra.mxu0 %v1950
      %v1996 = vpop.f32.mrf.mxu0
      %v1997 = vadd.f32 0.0, %v1996
      %v1998 = vpop.f32.mrf.mxu0
      %v1999 = vadd.f32 0.0, %v1998
      %2000 = vmatmul.bf16.gmra.mxu0 %v1953
      %v2001 = vpop.f32.mrf.mxu0
      %v2002 = vadd.f32 0.0, %v2001
      %v2003 = vpop.f32.mrf.mxu0
      %v2004 = vadd.f32 0.0, %v2003
      %2005 = vmatmul.bf16.gmra.mxu0 %v1956
      %v2006 = vpop.f32.mrf.mxu0
      %v2007 = vadd.f32 0.0, %v2006
      %v2008 = vpop.f32.mrf.mxu0
      %v2009 = vadd.f32 0.0, %v2008
      %2010 = vdwg.mxu0
      %v2011 = vpack.c.bf16 %v1972, %v1972
      %v2012 = vpack.c.bf16 %v1974, %v1974
      %v2013 = vpack.c.bf16 %v1977, %v1977
      %v2014 = vpack.c.bf16 %v1979, %v1979
      %v2015 = vpack.c.bf16 %v1982, %v1982
      %v2016 = vpack.c.bf16 %v1984, %v1984
      %v2017 = vpack.c.bf16 %v1987, %v1987
      %v2018 = vpack.c.bf16 %v1989, %v1989
      %v2019 = vpack.c.bf16 %v1992, %v1992
      %v2020 = vpack.c.bf16 %v1994, %v1994
      %v2021 = vpack.c.bf16 %v1997, %v1997
      %v2022 = vpack.c.bf16 %v1999, %v1999
      %v2023 = vpack.c.bf16 %v2002, %v2002
      %v2024 = vpack.c.bf16 %v2004, %v2004
      %v2025 = vpack.c.bf16 %v2007, %v2007
      %v2026 = vpack.c.bf16 %v2009, %v2009
      %vm2027 = vcmask 60416
      %2028 = vst.msk [vmem:[%s256] sm:$0xf] %vm2027, %v2011
      %2029 = vst.msk [vmem:[%s256 + $0x4] sm:$0xf] %vm2027, %v2012
      %2030 = vst.msk [vmem:[%s256 + $0x8] sm:$0xf] %vm2027, %v2013
      %2031 = vst.msk [vmem:[%s256 + $0xc] sm:$0xf] %vm2027, %v2014
      %2032 = vst.msk [vmem:[%s256 + $0x10] sm:$0xf] %vm2027, %v2015
      %2033 = vst.msk [vmem:[%s256 + $0x14] sm:$0xf] %vm2027, %v2016
      %2034 = vst.msk [vmem:[%s256 + $0x18] sm:$0xf] %vm2027, %v2017
      %2035 = vst.msk [vmem:[%s256 + $0x1c] sm:$0xf] %vm2027, %v2018
      %2036 = vst.msk [vmem:[%s256 + $0x20] sm:$0xf] %vm2027, %v2019
      %2037 = vst.msk [vmem:[%s256 + $0x24] sm:$0xf] %vm2027, %v2020
      %2038 = vst.msk [vmem:[%s256 + $0x28] sm:$0xf] %vm2027, %v2021
      %2039 = vst.msk [vmem:[%s256 + $0x2c] sm:$0xf] %vm2027, %v2022
      %2040 = vst.msk [vmem:[%s256 + $0x30] sm:$0xf] %vm2027, %v2023
      %2041 = vst.msk [vmem:[%s256 + $0x34] sm:$0xf] %vm2027, %v2024
      %2042 = vst.msk [vmem:[%s256 + $0x38] sm:$0xf] %vm2027, %v2025
      %2043 = vst.msk [vmem:[%s256 + $0x3c] sm:$0xf] %vm2027, %v2026
      %vm2044 = vcmask 64512
      %v2045 = vsel %vm2044, %v1972, 0.0
      %v2046 = vsel %vm2044, %v1974, 0.0
      %v2047 = vadd.f32 %v2045, %v2046
      %v2048 = vsel %vm2044, %v1977, 0.0
      %v2049 = vadd.f32 %v2047, %v2048
      %v2050 = vsel %vm2044, %v1979, 0.0
      %v2051 = vadd.f32 %v2049, %v2050
      %v2052 = vsel %vm2044, %v1982, 0.0
      %v2053 = vadd.f32 %v2051, %v2052
      %v2054 = vsel %vm2044, %v1984, 0.0
      %v2055 = vadd.f32 %v2053, %v2054
      %v2056 = vsel %vm2044, %v1987, 0.0
      %v2057 = vadd.f32 %v2055, %v2056
      %v2058 = vsel %vm2044, %v1989, 0.0
      %v2059 = vadd.f32 %v2057, %v2058
      %v2060 = vsel %vm2044, %v1992, 0.0
      %v2061 = vadd.f32 %v2059, %v2060
      %v2062 = vsel %vm2044, %v1994, 0.0
      %v2063 = vadd.f32 %v2061, %v2062
      %v2064 = vsel %vm2044, %v1997, 0.0
      %v2065 = vadd.f32 %v2063, %v2064
      %v2066 = vsel %vm2044, %v1999, 0.0
      %v2067 = vadd.f32 %v2065, %v2066
      %v2068 = vsel %vm2044, %v2002, 0.0
      %v2069 = vadd.f32 %v2067, %v2068
      %v2070 = vsel %vm2044, %v2004, 0.0
      %v2071 = vadd.f32 %v2069, %v2070
      %v2072 = vsel %vm2044, %v2007, 0.0
      %v2073 = vadd.f32 %v2071, %v2072
      %v2074 = vsel %vm2044, %v2009, 0.0
      %v2075 = vadd.f32 %v2073, %v2074
      %v2076 = vrot.slane %v2075, 4
      %v2077 = vadd.f32 %v2075, %v2076
      %v2078 = vrot.slane %v2077, 2
      %v2079 = vadd.f32 %v2077, %v2078
      %v2080 = vrot.slane %v2079, 1
      %v2081 = vadd.f32 %v2079, %v2080
      %vm2082 = vcmask 57344
      %2083 = vst.msk [vmem:[%s263] sm:$0x1] %vm2082, %v2081
      %v2084 = vmul.f32 %v1972, %v1972
      %v2085 = vmul.f32 %v1974, %v1974
      %v2086 = vmul.f32 %v1977, %v1977
      %v2087 = vmul.f32 %v1979, %v1979
      %v2088 = vmul.f32 %v1982, %v1982
      %v2089 = vmul.f32 %v1984, %v1984
      %v2090 = vmul.f32 %v1987, %v1987
      %v2091 = vmul.f32 %v1989, %v1989
      %v2092 = vmul.f32 %v1992, %v1992
      %v2093 = vmul.f32 %v1994, %v1994
      %v2094 = vmul.f32 %v1997, %v1997
      %v2095 = vmul.f32 %v1999, %v1999
      %v2096 = vmul.f32 %v2002, %v2002
      %v2097 = vmul.f32 %v2004, %v2004
      %v2098 = vmul.f32 %v2007, %v2007
      %v2099 = vmul.f32 %v2009, %v2009
      %v2100 = vsel %vm2044, %v2084, 0.0
      %v2101 = vsel %vm2044, %v2085, 0.0
      %v2102 = vadd.f32 %v2100, %v2101
      %v2103 = vsel %vm2044, %v2086, 0.0
      %v2104 = vadd.f32 %v2102, %v2103
      %v2105 = vsel %vm2044, %v2087, 0.0
      %v2106 = vadd.f32 %v2104, %v2105
      %v2107 = vsel %vm2044, %v2088, 0.0
      %v2108 = vadd.f32 %v2106, %v2107
      %v2109 = vsel %vm2044, %v2089, 0.0
      %v2110 = vadd.f32 %v2108, %v2109
      %v2111 = vsel %vm2044, %v2090, 0.0
      %v2112 = vadd.f32 %v2110, %v2111
      %v2113 = vsel %vm2044, %v2091, 0.0
      %v2114 = vadd.f32 %v2112, %v2113
      %v2115 = vsel %vm2044, %v2092, 0.0
      %v2116 = vadd.f32 %v2114, %v2115
      %v2117 = vsel %vm2044, %v2093, 0.0
      %v2118 = vadd.f32 %v2116, %v2117
      %v2119 = vsel %vm2044, %v2094, 0.0
      %v2120 = vadd.f32 %v2118, %v2119
      %v2121 = vsel %vm2044, %v2095, 0.0
      %v2122 = vadd.f32 %v2120, %v2121
      %v2123 = vsel %vm2044, %v2096, 0.0
      %v2124 = vadd.f32 %v2122, %v2123
      %v2125 = vsel %vm2044, %v2097, 0.0
      %v2126 = vadd.f32 %v2124, %v2125
      %v2127 = vsel %vm2044, %v2098, 0.0
      %v2128 = vadd.f32 %v2126, %v2127
      %v2129 = vsel %vm2044, %v2099, 0.0
      %v2130 = vadd.f32 %v2128, %v2129
      %v2131 = vrot.slane %v2130, 4
      %v2132 = vadd.f32 %v2130, %v2131
      %v2133 = vrot.slane %v2132, 2
      %v2134 = vadd.f32 %v2132, %v2133
      %v2135 = vrot.slane %v2134, 1
      %v2136 = vadd.f32 %v2134, %v2135
      %2137 = vst.msk [vmem:[%s270] sm:$0x1] %vm2082, %v2136
      %p2138 = scmp.lt.s32.totalorder %s20, 1
      %s2139 = scalar_select %p2138, %s20, 1
      %p2140 = scmp.lt.s32.totalorder %s21, 1
      %s2141 = scalar_select %p2140, %s21, 1
      %s2142 = smul.addr %s2141, 16
      %s2143 = smul.addr %s2139, 32
      %s2144 = sadd.s32 %s2142, %s2143
      %s2145 = smul.addr %s2144, 4
      %s2146 = scalar_lea.vmem %s2, %s2145
      %p2147 = scmp.lt.s32.totalorder %s20, 1
      %s2148 = scalar_select %p2147, %s20, 1
      %p2149 = scmp.lt.s32.totalorder %s21, 1
      %s2150 = scalar_select %p2149, %s21, 1
      %s2151 = smul.addr %s2148, 2
      %s2152 = sadd.s32 %s2150, %s2151
      %s2153 = scalar_lea.vmem %s3, %s2152
      %p2154 = scmp.lt.s32.totalorder %s20, 1
      %s2155 = scalar_select %p2154, %s20, 1
      %p2156 = scmp.lt.s32.totalorder %s21, 1
      %s2157 = scalar_select %p2156, %s21, 1
      %s2158 = smul.addr %s2155, 2
      %s2159 = sadd.s32 %s2157, %s2158
      %s2160 = scalar_lea.vmem %s4, %s2159
      // Predicated region
      $region29: #{convolutional_forward.2} parent=27 // pred_check
        %p2161 = pneg %p97
      $region30: #{convolutional_forward.2} parent=27 // pred_check_branch
        %2163 = sbr.rel (%p2161) target = $region32
      $region31: #{convolutional_forward.2} parent=27 // pred_region
        _
      $region32: #{convolutional_forward.2} parent=27 // pred_fallthru
        _
      // Predicated region
      $region33: #{convolutional_forward.2} parent=27 // pred_check
        %p2164 = pneg %p125
      $region34: #{convolutional_forward.2} parent=27 // pred_check_branch
        %2166 = sbr.rel (%p2164) target = $region36
      $region35: #{convolutional_forward.2} parent=27 // pred_region
        _
      $region36: #{convolutional_forward.2} parent=27 // pred_fallthru
        _
      // Predicated region
      $region37: #{convolutional_forward.2} parent=27 // pred_check
        %p2167 = pneg %p153
      $region38: #{convolutional_forward.2} parent=27 // pred_check_branch
        %2169 = sbr.rel (%p2167) target = $region40
      $region39: #{convolutional_forward.2} parent=27 // pred_region
        _
      $region40: #{convolutional_forward.2} parent=27 // pred_fallthru
        _
    $region28: #{convolutional_forward.2} parent=5 // pred_fallthru
      _
    %p2170 = scmp.le.s32.totalorder 2, %s11
    // Predicated region
    $region41: #{convolutional_forward.2} parent=5 // pred_check
      %p2171 = pneg %p2170
    $region42: #{convolutional_forward.2} parent=5 // pred_check_branch
      %2173 = sbr.rel (%p2171) target = $region44
    $region43: #{convolutional_forward.2} parent=5 // pred_region
      %s2174 = ssub.s32 %s11, 2
      // Predicated region
      $region45: #{convolutional_forward.2} parent=43 // pred_check
        %p2175 = pneg %p103
      $region46: #{convolutional_forward.2} parent=43 // pred_check_branch
        %2177 = sbr.rel (%p2175) target = $region48
      $region47: #{convolutional_forward.2} parent=43 // pred_region
        %p2178 = scmp.lt.s32.totalorder %s22, 1
        %s2179 = scalar_select %p2178, %s22, 1
        %p2180 = scmp.lt.s32.totalorder %s23, 1
        %s2181 = scalar_select %p2180, %s23, 1
        %s2182 = smul.addr %s2181, 16
        %s2183 = smul.addr %s2179, 32
        %s2184 = sadd.s32 %s2182, %s2183
        %s2185 = smul.addr %s2184, 4
        %s2186 = scalar_lea.vmem %s2, %s2185
      $region48: #{convolutional_forward.2} parent=43 // pred_fallthru
        _
      // Predicated region
      $region49: #{convolutional_forward.2} parent=43 // pred_check
        %p2187 = pneg %p131
      $region50: #{convolutional_forward.2} parent=43 // pred_check_branch
        %2189 = sbr.rel (%p2187) target = $region52
      $region51: #{convolutional_forward.2} parent=43 // pred_region
        %p2190 = scmp.lt.s32.totalorder %s22, 1
        %s2191 = scalar_select %p2190, %s22, 1
        %p2192 = scmp.lt.s32.totalorder %s23, 1
        %s2193 = scalar_select %p2192, %s23, 1
        %s2194 = smul.addr %s2191, 2
        %s2195 = sadd.s32 %s2193, %s2194
        %s2196 = scalar_lea.vmem %s3, %s2195
      $region52: #{convolutional_forward.2} parent=43 // pred_fallthru
        _
      // Predicated region
      $region53: #{convolutional_forward.2} parent=43 // pred_check
        %p2197 = pneg %p159
      $region54: #{convolutional_forward.2} parent=43 // pred_check_branch
        %2199 = sbr.rel (%p2197) target = $region56
      $region55: #{convolutional_forward.2} parent=43 // pred_region
        %p2200 = scmp.lt.s32.totalorder %s22, 1
        %s2201 = scalar_select %p2200, %s22, 1
        %p2202 = scmp.lt.s32.totalorder %s23, 1
        %s2203 = scalar_select %p2202, %s23, 1
        %s2204 = smul.addr %s2201, 2
        %s2205 = sadd.s32 %s2203, %s2204
        %s2206 = scalar_lea.vmem %s4, %s2205
      $region56: #{convolutional_forward.2} parent=43 // pred_fallthru
        _
    $region44: #{convolutional_forward.2} parent=5 // pred_fallthru
      _
  $region6: #{convolutional_forward.2} parent=0 // loop_footer
    %s15 = sadd.s32 1, %s11
  $region7: #{convolutional_forward.2} parent=0 // loop_footer_branch
    %10 = sbr.rel target = $region3
  $region8: #{convolutional_forward.2} parent=0 // loop_exit
    _

</llo_original>
